<compile_context>
chip_gen: v6e
topology: v6e:2x2x1
jax: 0.10.0
libtpu: 0.0.40
codegen_flags: <defaults>
</compile_context>

<pallas_src>
import functools

import jax
import jax.numpy as jnp
import numpy as np
from jax import lax
from jax.experimental import pallas as pl
from jax.experimental.pallas import tpu as pltpu


# ----------------------------- Pallas kernel --------------------------------
def _conv_bn_relu_kernel(x_ref, w_ref, scale_ref, shift_ref, o_ref, xcol_ref, *,
                         c_in, h, w, kh, kw, s, p, ho, wo):
    # x_ref:     (C_in, H*W)     f32  one unpadded image, (row, col) flattened to lanes
    # w_ref:     (C_out, K)      f32  K = kh*kw*C_in, tap-major / channel-minor columns
    # scale_ref: (C_out, 1)      f32  folded BN scale = gamma / sqrt(var + eps)
    # shift_ref: (C_out, 1)      f32  folded BN shift = beta - mean * scale
    # o_ref:     (C_out, Ho*Wo)  f32  final output tile (lane-dense, no margin columns)
    # xcol_ref:  (K, Ho*Wo)      f32  VMEM scratch: im2col columns

    # 1) Zero the column buffer; columns no tap writes implement the zero padding halo.
    xcol_ref[...] = jnp.zeros(xcol_ref.shape, xcol_ref.dtype)

    # 2) Build the im2col matrix with small in-VMEM row copies (all offsets static).
    for ki in range(kh):
        for kj in range(kw):
            t = ki * kw + kj
            # Static output-row / output-col ranges for which this tap reads inside the image.
            oh_lo = max(0, -((ki - p) // s))                 # ceil((p - ki) / s)
            oh_hi = min(ho, (h - 1 + p - ki) // s + 1)
            ow_lo = max(0, -((kj - p) // s))
            ow_hi = min(wo, (w - 1 + p - kj) // s + 1)
            n_ow = ow_hi - ow_lo
            if n_ow <= 0 or oh_hi <= oh_lo:
                continue
            iw0 = ow_lo * s + kj - p                         # first input column this tap reads
            for oh in range(oh_lo, oh_hi):
                ih = oh * s + ki - p                         # input row feeding output row oh
                src = ih * w + iw0                           # static lane offset into the image
                if s == 1:
                    row = x_ref[:, pl.ds(src, n_ow)]
                else:
                    # TODO(synk): stride > 1 path (strided lane read) is untested in __main__.
                    row = x_ref[:, pl.ds(src, n_ow, stride=s)]
                xcol_ref[t * c_in:(t + 1) * c_in,
                         pl.ds(oh * wo + ow_lo, n_ow)] = row

    # 3) One fat MXU matmul over K = kh*kw*C_in, fused BN affine + ReLU, and a single
    #    lane-dense store of the final tile (no post-kernel layout pass needed).
    acc = jnp.dot(w_ref[...], xcol_ref[...], preferred_element_type=jnp.float32)
    y = acc * scale_ref[...] + shift_ref[...]
    o_ref[...] = jnp.maximum(y, 0.0).astype(o_ref.dtype)


# ------------------------------ One-time prep --------------------------------
def prepare_basic_conv2d_params(weight, gamma, beta, running_mean, running_var, *, eps=1e-3):
    """Hoisted out of the per-call path (inference weights are static): reorder conv
    weights to match the im2col row order and fold BatchNorm into scale/shift."""
    c_out, c_in, kh, kw = weight.shape
    # xcol row order is tap-major, channel-minor: k = (ki*kw + kj)*C_in + c.
    w2 = jnp.transpose(weight, (0, 2, 3, 1)).reshape(c_out, kh * kw * c_in)
    w2 = w2.astype(jnp.float32)
    inv = gamma / jnp.sqrt(running_var + eps)
    scale = inv.reshape(c_out, 1).astype(jnp.float32)
    shift = (beta - running_mean * inv).reshape(c_out, 1).astype(jnp.float32)
    # NOTE: scale could be pre-folded into w2 (drops one VPU multiply from the epilogue)
    # at the cost of slightly different rounding; kept separate to match the reference.
    return w2, scale, shift


# ------------------------------ Forward wrapper -------------------------------
def basic_conv2d_forward(x, w2, scale, shift, *, kh, kw, stride=1, padding=1):
    """x: (N, C_in, H, W) f32; w2/scale/shift from prepare_basic_conv2d_params."""
    n, c_in, h, w = x.shape
    c_out = w2.shape[0]
    s, p = int(stride), int(padding)
    ho = (h + 2 * p - kh) // s + 1
    wo = (w + 2 * p - kw) // s + 1
    l_out = ho * wo
    k = kh * kw * c_in

    # Free, layout-preserving reshape: (row, col) merged onto the lane axis.
    x_flat = x.reshape(n, c_in, h * w)

    kernel = functools.partial(_conv_bn_relu_kernel, c_in=c_in, h=h, w=w,
                               kh=kh, kw=kw, s=s, p=p, ho=ho, wo=wo)

    # NOTE: on single-TC chips (v5e/v6e) the N images could additionally be packed onto
    # the lane axis of a single grid step to halve fixed per-step overhead; grid=(N,) is
    # kept so both v7x TensorCores get independent work.
    out = pl.pallas_call(
        kernel,
        out_shape=jax.ShapeDtypeStruct((n, c_out, l_out), jnp.float32),
        grid_spec=pltpu.PrefetchScalarGridSpec(
            num_scalar_prefetch=0,
            grid=(n,),
            in_specs=[
                pl.BlockSpec((None, c_in, h * w), lambda i: (i, 0, 0)),   # image (unpadded)
                pl.BlockSpec((c_out, k), lambda i: (0, 0)),               # reordered weights
                pl.BlockSpec((c_out, 1), lambda i: (0, 0)),               # BN scale
                pl.BlockSpec((c_out, 1), lambda i: (0, 0)),               # BN shift
            ],
            out_specs=pl.BlockSpec((None, c_out, l_out), lambda i: (i, 0, 0)),
            scratch_shapes=[pltpu.VMEM((k, l_out), jnp.float32)],         # im2col columns
        ),
        compiler_params=pltpu.CompilerParams(
            dimension_semantics=("parallel",)),
    )(x_flat, w2, scale, shift)

    # (N, C_out, Ho*Wo) -> (N, C_out, Ho, Wo): minor-dim split, layout-preserving (free).
    return out.reshape(n, c_out, ho, wo)


# --------------------------------- Reference ---------------------------------
def _reference(x, weight, gamma, beta, running_mean, running_var,
               *, stride=1, padding=1, eps=1e-3):
    y = lax.conv_general_dilated(
        x, weight, window_strides=(stride, stride),
        padding=((padding, padding), (padding, padding)),
        dimension_numbers=("NCHW", "OIHW", "NCHW"),
        precision=lax.Precision.HIGHEST)
    inv = gamma / jnp.sqrt(running_var + eps)
    y = y * inv[None, :, None, None] + (beta - running_mean * inv)[None, :, None, None]
    return jnp.maximum(y, 0.0)


# ----------------------------------- Main ------------------------------------
if __name__ == "__main__":
    # BasicConv2d(in_channels=4, out_channels=8, kernel_size=3, stride=1, padding=1)
    N, C_in, H, W = 2, 4, 16, 16
    C_out, kh, kw = 8, 3, 3
    stride, padding, eps = 1, 1, 1e-3

    key = jax.random.PRNGKey(0)
    k_x, k_w, k_g, k_b, k_m, k_v = jax.random.split(key, 6)

    x = jax.random.normal(k_x, (N, C_in, H, W), dtype=jnp.float32)
    weight = 0.1 * jax.random.normal(k_w, (C_out, C_in, kh, kw), dtype=jnp.float32)
    gamma = 1.0 + 0.1 * jax.random.normal(k_g, (C_out,), dtype=jnp.float32)
    beta = 0.1 * jax.random.normal(k_b, (C_out,), dtype=jnp.float32)
    running_mean = 0.05 * jax.random.normal(k_m, (C_out,), dtype=jnp.float32)
    running_var = jax.random.uniform(k_v, (C_out,), minval=0.5, maxval=1.5,
                                     dtype=jnp.float32)

    # One-time weight/BN prep (inference); the jitted per-call path is just the kernel.
    w2, scale, shift = prepare_basic_conv2d_params(
        weight, gamma, beta, running_mean, running_var, eps=eps)

    fwd = jax.jit(functools.partial(basic_conv2d_forward,
                                    kh=kh, kw=kw, stride=stride, padding=padding))
    out = jax.block_until_ready(fwd(x, w2, scale, shift))

    ref = _reference(x, weight, gamma, beta, running_mean, running_var,
                     stride=stride, padding=padding, eps=eps)
    # Tolerance covers MXU matmul pass rounding for f32 operands (bf16 product passes
    # in the worst case); the reference itself is full-precision f32.
    np.testing.assert_allclose(np.asarray(out), np.asarray(ref), rtol=2e-2, atol=2e-2)
    print("KERNEL_OK")
</pallas_src>

<mosaic_0001>
module attributes {stable_mosaic.version = 11 : i64} {
  func.func @_conv_bn_relu_kernel(%arg0: i32, %arg1: memref<1x4x256xf32, #tpu.memory_space<vmem>>, %arg2: memref<8x36xf32, #tpu.memory_space<vmem>>, %arg3: memref<8x1xf32, #tpu.memory_space<vmem>>, %arg4: memref<8x1xf32, #tpu.memory_space<vmem>>, %arg5: memref<1x8x256xf32, #tpu.memory_space<vmem>>, %arg6: memref<36x256xf32, #tpu.memory_space<vmem>>) attributes {dimension_semantics = [#tpu.dimension_semantics<parallel>], iteration_bounds = array<i64: 2>, scalar_prefetch = 0 : i64, scratch_operands = 1 : i64, tpu.core_type = #tpu.core_type<tc>, window_params = [{transform_indices = @transform_0, window_bounds = array<i64: 1, 4, 256>}, {pipeline_mode = #tpu.pipeline_mode<synchronous>, transform_indices = @transform_1, window_bounds = array<i64: 8, 36>}, {pipeline_mode = #tpu.pipeline_mode<synchronous>, transform_indices = @transform_2, window_bounds = array<i64: 8, 1>}, {pipeline_mode = #tpu.pipeline_mode<synchronous>, transform_indices = @transform_3, window_bounds = array<i64: 8, 1>}, {transform_indices = @transform_4, window_bounds = array<i64: 1, 8, 256>}]} {
    %cst = arith.constant 0.000000e+00 : f32
    %0 = vector.broadcast %cst : f32 to vector<36x256xf32>
    %c0 = arith.constant 0 : index
    %c0_0 = arith.constant 0 : index
    %1 = vector.load %arg6[%c0, %c0_0] : memref<36x256xf32, #tpu.memory_space<vmem>>, vector<36x256xf32>
    tpu.vector_store %arg6[%c0, %c0_0], %0 {strides = array<i32>} : memref<36x256xf32, #tpu.memory_space<vmem>>, vector<36x256xf32>,
    %c0_1 = arith.constant 0 : index
    %c0_2 = arith.constant 0 : index
    %c0_3 = arith.constant 0 : index
    %2 = vector.load %arg1[%c0_1, %c0_2, %c0_3] : memref<1x4x256xf32, #tpu.memory_space<vmem>>, vector<1x4x15xf32>
    %3 = vector.shape_cast %2 : vector<1x4x15xf32> to vector<4x15xf32>
    %c0_4 = arith.constant 0 : index
    %c17 = arith.constant 17 : index
    %4 = vector.load %arg6[%c0_4, %c17] : memref<36x256xf32, #tpu.memory_space<vmem>>, vector<4x15xf32>
    tpu.vector_store %arg6[%c0_4, %c17], %3 {strides = array<i32>} : memref<36x256xf32, #tpu.memory_space<vmem>>, vector<4x15xf32>,
    %c0_5 = arith.constant 0 : index
    %c0_6 = arith.constant 0 : index
    %c16 = arith.constant 16 : index
    %5 = vector.load %arg1[%c0_5, %c0_6, %c16] : memref<1x4x256xf32, #tpu.memory_space<vmem>>, vector<1x4x15xf32>
    %6 = vector.shape_cast %5 : vector<1x4x15xf32> to vector<4x15xf32>
    %c0_7 = arith.constant 0 : index
    %c33 = arith.constant 33 : index
    %7 = vector.load %arg6[%c0_7, %c33] : memref<36x256xf32, #tpu.memory_space<vmem>>, vector<4x15xf32>
    tpu.vector_store %arg6[%c0_7, %c33], %6 {strides = array<i32>} : memref<36x256xf32, #tpu.memory_space<vmem>>, vector<4x15xf32>,
    %c0_8 = arith.constant 0 : index
    %c0_9 = arith.constant 0 : index
    %c32 = arith.constant 32 : index
    %8 = vector.load %arg1[%c0_8, %c0_9, %c32] : memref<1x4x256xf32, #tpu.memory_space<vmem>>, vector<1x4x15xf32>
    %9 = vector.shape_cast %8 : vector<1x4x15xf32> to vector<4x15xf32>
    %c0_10 = arith.constant 0 : index
    %c49 = arith.constant 49 : index
    %10 = vector.load %arg6[%c0_10, %c49] : memref<36x256xf32, #tpu.memory_space<vmem>>, vector<4x15xf32>
    tpu.vector_store %arg6[%c0_10, %c49], %9 {strides = array<i32>} : memref<36x256xf32, #tpu.memory_space<vmem>>, vector<4x15xf32>,
    %c0_11 = arith.constant 0 : index
    %c0_12 = arith.constant 0 : index
    %c48 = arith.constant 48 : index
    %11 = vector.load %arg1[%c0_11, %c0_12, %c48] : memref<1x4x256xf32, #tpu.memory_space<vmem>>, vector<1x4x15xf32>
    %12 = vector.shape_cast %11 : vector<1x4x15xf32> to vector<4x15xf32>
    %c0_13 = arith.constant 0 : index
    %c65 = arith.constant 65 : index
    %13 = vector.load %arg6[%c0_13, %c65] : memref<36x256xf32, #tpu.memory_space<vmem>>, vector<4x15xf32>
    tpu.vector_store %arg6[%c0_13, %c65], %12 {strides = array<i32>} : memref<36x256xf32, #tpu.memory_space<vmem>>, vector<4x15xf32>,
    %c0_14 = arith.constant 0 : index
    %c0_15 = arith.constant 0 : index
    %c64 = arith.constant 64 : index
    %14 = vector.load %arg1[%c0_14, %c0_15, %c64] : memref<1x4x256xf32, #tpu.memory_space<vmem>>, vector<1x4x15xf32>
    %15 = vector.shape_cast %14 : vector<1x4x15xf32> to vector<4x15xf32>
    %c0_16 = arith.constant 0 : index
    %c81 = arith.constant 81 : index
    %16 = vector.load %arg6[%c0_16, %c81] : memref<36x256xf32, #tpu.memory_space<vmem>>, vector<4x15xf32>
    tpu.vector_store %arg6[%c0_16, %c81], %15 {strides = array<i32>} : memref<36x256xf32, #tpu.memory_space<vmem>>, vector<4x15xf32>,
    %c0_17 = arith.constant 0 : index
    %c0_18 = arith.constant 0 : index
    %c80 = arith.constant 80 : index
    %17 = vector.load %arg1[%c0_17, %c0_18, %c80] : memref<1x4x256xf32, #tpu.memory_space<vmem>>, vector<1x4x15xf32>
    %18 = vector.shape_cast %17 : vector<1x4x15xf32> to vector<4x15xf32>
    %c0_19 = arith.constant 0 : index
    %c97 = arith.constant 97 : index
    %19 = vector.load %arg6[%c0_19, %c97] : memref<36x256xf32, #tpu.memory_space<vmem>>, vector<4x15xf32>
    tpu.vector_store %arg6[%c0_19, %c97], %18 {strides = array<i32>} : memref<36x256xf32, #tpu.memory_space<vmem>>, vector<4x15xf32>,
    %c0_20 = arith.constant 0 : index
    %c0_21 = arith.constant 0 : index
    %c96 = arith.constant 96 : index
    %20 = vector.load %arg1[%c0_20, %c0_21, %c96] : memref<1x4x256xf32, #tpu.memory_space<vmem>>, vector<1x4x15xf32>
    %21 = vector.shape_cast %20 : vector<1x4x15xf32> to vector<4x15xf32>
    %c0_22 = arith.constant 0 : index
    %c113 = arith.constant 113 : index
    %22 = vector.load %arg6[%c0_22, %c113] : memref<36x256xf32, #tpu.memory_space<vmem>>, vector<4x15xf32>
    tpu.vector_store %arg6[%c0_22, %c113], %21 {strides = array<i32>} : memref<36x256xf32, #tpu.memory_space<vmem>>, vector<4x15xf32>,
    %c0_23 = arith.constant 0 : index
    %c0_24 = arith.constant 0 : index
    %c112 = arith.constant 112 : index
    %23 = vector.load %arg1[%c0_23, %c0_24, %c112] : memref<1x4x256xf32, #tpu.memory_space<vmem>>, vector<1x4x15xf32>
    %24 = vector.shape_cast %23 : vector<1x4x15xf32> to vector<4x15xf32>
    %c0_25 = arith.constant 0 : index
    %c129 = arith.constant 129 : index
    %25 = vector.load %arg6[%c0_25, %c129] : memref<36x256xf32, #tpu.memory_space<vmem>>, vector<4x15xf32>
    tpu.vector_store %arg6[%c0_25, %c129], %24 {strides = array<i32>} : memref<36x256xf32, #tpu.memory_space<vmem>>, vector<4x15xf32>,
    %c0_26 = arith.constant 0 : index
    %c0_27 = arith.constant 0 : index
    %c128 = arith.constant 128 : index
    %26 = vector.load %arg1[%c0_26, %c0_27, %c128] : memref<1x4x256xf32, #tpu.memory_space<vmem>>, vector<1x4x15xf32>
    %27 = vector.shape_cast %26 : vector<1x4x15xf32> to vector<4x15xf32>
    %c0_28 = arith.constant 0 : index
    %c145 = arith.constant 145 : index
    %28 = vector.load %arg6[%c0_28, %c145] : memref<36x256xf32, #tpu.memory_space<vmem>>, vector<4x15xf32>
    tpu.vector_store %arg6[%c0_28, %c145], %27 {strides = array<i32>} : memref<36x256xf32, #tpu.memory_space<vmem>>, vector<4x15xf32>,
    %c0_29 = arith.constant 0 : index
    %c0_30 = arith.constant 0 : index
    %c144 = arith.constant 144 : index
    %29 = vector.load %arg1[%c0_29, %c0_30, %c144] : memref<1x4x256xf32, #tpu.memory_space<vmem>>, vector<1x4x15xf32>
    %30 = vector.shape_cast %29 : vector<1x4x15xf32> to vector<4x15xf32>
    %c0_31 = arith.constant 0 : index
    %c161 = arith.constant 161 : index
    %31 = vector.load %arg6[%c0_31, %c161] : memref<36x256xf32, #tpu.memory_space<vmem>>, vector<4x15xf32>
    tpu.vector_store %arg6[%c0_31, %c161], %30 {strides = array<i32>} : memref<36x256xf32, #tpu.memory_space<vmem>>, vector<4x15xf32>,
    %c0_32 = arith.constant 0 : index
    %c0_33 = arith.constant 0 : index
    %c160 = arith.constant 160 : index
    %32 = vector.load %arg1[%c0_32, %c0_33, %c160] : memref<1x4x256xf32, #tpu.memory_space<vmem>>, vector<1x4x15xf32>
    %33 = vector.shape_cast %32 : vector<1x4x15xf32> to vector<4x15xf32>
    %c0_34 = arith.constant 0 : index
    %c177 = arith.constant 177 : index
    %34 = vector.load %arg6[%c0_34, %c177] : memref<36x256xf32, #tpu.memory_space<vmem>>, vector<4x15xf32>
    tpu.vector_store %arg6[%c0_34, %c177], %33 {strides = array<i32>} : memref<36x256xf32, #tpu.memory_space<vmem>>, vector<4x15xf32>,
    %c0_35 = arith.constant 0 : index
    %c0_36 = arith.constant 0 : index
    %c176 = arith.constant 176 : index
    %35 = vector.load %arg1[%c0_35, %c0_36, %c176] : memref<1x4x256xf32, #tpu.memory_space<vmem>>, vector<1x4x15xf32>
    %36 = vector.shape_cast %35 : vector<1x4x15xf32> to vector<4x15xf32>
    %c0_37 = arith.constant 0 : index
    %c193 = arith.constant 193 : index
    %37 = vector.load %arg6[%c0_37, %c193] : memref<36x256xf32, #tpu.memory_space<vmem>>, vector<4x15xf32>
    tpu.vector_store %arg6[%c0_37, %c193], %36 {strides = array<i32>} : memref<36x256xf32, #tpu.memory_space<vmem>>, vector<4x15xf32>,
    %c0_38 = arith.constant 0 : index
    %c0_39 = arith.constant 0 : index
    %c192 = arith.constant 192 : index
    %38 = vector.load %arg1[%c0_38, %c0_39, %c192] : memref<1x4x256xf32, #tpu.memory_space<vmem>>, vector<1x4x15xf32>
    %39 = vector.shape_cast %38 : vector<1x4x15xf32> to vector<4x15xf32>
    %c0_40 = arith.constant 0 : index
    %c209 = arith.constant 209 : index
    %40 = vector.load %arg6[%c0_40, %c209] : memref<36x256xf32, #tpu.memory_space<vmem>>, vector<4x15xf32>
    tpu.vector_store %arg6[%c0_40, %c209], %39 {strides = array<i32>} : memref<36x256xf32, #tpu.memory_space<vmem>>, vector<4x15xf32>,
    %c0_41 = arith.constant 0 : index
    %c0_42 = arith.constant 0 : index
    %c208 = arith.constant 208 : index
    %41 = vector.load %arg1[%c0_41, %c0_42, %c208] : memref<1x4x256xf32, #tpu.memory_space<vmem>>, vector<1x4x15xf32>
    %42 = vector.shape_cast %41 : vector<1x4x15xf32> to vector<4x15xf32>
    %c0_43 = arith.constant 0 : index
    %c225 = arith.constant 225 : index
    %43 = vector.load %arg6[%c0_43, %c225] : memref<36x256xf32, #tpu.memory_space<vmem>>, vector<4x15xf32>
    tpu.vector_store %arg6[%c0_43, %c225], %42 {strides = array<i32>} : memref<36x256xf32, #tpu.memory_space<vmem>>, vector<4x15xf32>,
    %c0_44 = arith.constant 0 : index
    %c0_45 = arith.constant 0 : index
    %c224 = arith.constant 224 : index
    %44 = vector.load %arg1[%c0_44, %c0_45, %c224] : memref<1x4x256xf32, #tpu.memory_space<vmem>>, vector<1x4x15xf32>
    %45 = vector.shape_cast %44 : vector<1x4x15xf32> to vector<4x15xf32>
    %c0_46 = arith.constant 0 : index
    %c241 = arith.constant 241 : index
    %46 = vector.load %arg6[%c0_46, %c241] : memref<36x256xf32, #tpu.memory_space<vmem>>, vector<4x15xf32>
    tpu.vector_store %arg6[%c0_46, %c241], %45 {strides = array<i32>} : memref<36x256xf32, #tpu.memory_space<vmem>>, vector<4x15xf32>,
    %c0_47 = arith.constant 0 : index
    %c0_48 = arith.constant 0 : index
    %c0_49 = arith.constant 0 : index
    %47 = vector.load %arg1[%c0_47, %c0_48, %c0_49] : memref<1x4x256xf32, #tpu.memory_space<vmem>>, vector<1x4x16xf32>
    %48 = vector.shape_cast %47 : vector<1x4x16xf32> to vector<4x16xf32>
    %c4 = arith.constant 4 : index
    %c16_50 = arith.constant 16 : index
    %49 = vector.load %arg6[%c4, %c16_50] : memref<36x256xf32, #tpu.memory_space<vmem>>, vector<4x16xf32>
    tpu.vector_store %arg6[%c4, %c16_50], %48 {strides = array<i32>} : memref<36x256xf32, #tpu.memory_space<vmem>>, vector<4x16xf32>,
    %c0_51 = arith.constant 0 : index
    %c0_52 = arith.constant 0 : index
    %c16_53 = arith.constant 16 : index
    %50 = vector.load %arg1[%c0_51, %c0_52, %c16_53] : memref<1x4x256xf32, #tpu.memory_space<vmem>>, vector<1x4x16xf32>
    %51 = vector.shape_cast %50 : vector<1x4x16xf32> to vector<4x16xf32>
    %c4_54 = arith.constant 4 : index
    %c32_55 = arith.constant 32 : index
    %52 = vector.load %arg6[%c4_54, %c32_55] : memref<36x256xf32, #tpu.memory_space<vmem>>, vector<4x16xf32>
    tpu.vector_store %arg6[%c4_54, %c32_55], %51 {strides = array<i32>} : memref<36x256xf32, #tpu.memory_space<vmem>>, vector<4x16xf32>,
    %c0_56 = arith.constant 0 : index
    %c0_57 = arith.constant 0 : index
    %c32_58 = arith.constant 32 : index
    %53 = vector.load %arg1[%c0_56, %c0_57, %c32_58] : memref<1x4x256xf32, #tpu.memory_space<vmem>>, vector<1x4x16xf32>
    %54 = vector.shape_cast %53 : vector<1x4x16xf32> to vector<4x16xf32>
    %c4_59 = arith.constant 4 : index
    %c48_60 = arith.constant 48 : index
    %55 = vector.load %arg6[%c4_59, %c48_60] : memref<36x256xf32, #tpu.memory_space<vmem>>, vector<4x16xf32>
    tpu.vector_store %arg6[%c4_59, %c48_60], %54 {strides = array<i32>} : memref<36x256xf32, #tpu.memory_space<vmem>>, vector<4x16xf32>,
    %c0_61 = arith.constant 0 : index
    %c0_62 = arith.constant 0 : index
    %c48_63 = arith.constant 48 : index
    %56 = vector.load %arg1[%c0_61, %c0_62, %c48_63] : memref<1x4x256xf32, #tpu.memory_space<vmem>>, vector<1x4x16xf32>
    %57 = vector.shape_cast %56 : vector<1x4x16xf32> to vector<4x16xf32>
    %c4_64 = arith.constant 4 : index
    %c64_65 = arith.constant 64 : index
    %58 = vector.load %arg6[%c4_64, %c64_65] : memref<36x256xf32, #tpu.memory_space<vmem>>, vector<4x16xf32>
    tpu.vector_store %arg6[%c4_64, %c64_65], %57 {strides = array<i32>} : memref<36x256xf32, #tpu.memory_space<vmem>>, vector<4x16xf32>,
    %c0_66 = arith.constant 0 : index
    %c0_67 = arith.constant 0 : index
    %c64_68 = arith.constant 64 : index
    %59 = vector.load %arg1[%c0_66, %c0_67, %c64_68] : memref<1x4x256xf32, #tpu.memory_space<vmem>>, vector<1x4x16xf32>
    %60 = vector.shape_cast %59 : vector<1x4x16xf32> to vector<4x16xf32>
    %c4_69 = arith.constant 4 : index
    %c80_70 = arith.constant 80 : index
    %61 = vector.load %arg6[%c4_69, %c80_70] : memref<36x256xf32, #tpu.memory_space<vmem>>, vector<4x16xf32>
    tpu.vector_store %arg6[%c4_69, %c80_70], %60 {strides = array<i32>} : memref<36x256xf32, #tpu.memory_space<vmem>>, vector<4x16xf32>,
    %c0_71 = arith.constant 0 : index
    %c0_72 = arith.constant 0 : index
    %c80_73 = arith.constant 80 : index
    %62 = vector.load %arg1[%c0_71, %c0_72, %c80_73] : memref<1x4x256xf32, #tpu.memory_space<vmem>>, vector<1x4x16xf32>
    %63 = vector.shape_cast %62 : vector<1x4x16xf32> to vector<4x16xf32>
    %c4_74 = arith.constant 4 : index
    %c96_75 = arith.constant 96 : index
    %64 = vector.load %arg6[%c4_74, %c96_75] : memref<36x256xf32, #tpu.memory_space<vmem>>, vector<4x16xf32>
    tpu.vector_store %arg6[%c4_74, %c96_75], %63 {strides = array<i32>} : memref<36x256xf32, #tpu.memory_space<vmem>>, vector<4x16xf32>,
    %c0_76 = arith.constant 0 : index
    %c0_77 = arith.constant 0 : index
    %c96_78 = arith.constant 96 : index
    %65 = vector.load %arg1[%c0_76, %c0_77, %c96_78] : memref<1x4x256xf32, #tpu.memory_space<vmem>>, vector<1x4x16xf32>
    %66 = vector.shape_cast %65 : vector<1x4x16xf32> to vector<4x16xf32>
    %c4_79 = arith.constant 4 : index
    %c112_80 = arith.constant 112 : index
    %67 = vector.load %arg6[%c4_79, %c112_80] : memref<36x256xf32, #tpu.memory_space<vmem>>, vector<4x16xf32>
    tpu.vector_store %arg6[%c4_79, %c112_80], %66 {strides = array<i32>} : memref<36x256xf32, #tpu.memory_space<vmem>>, vector<4x16xf32>,
    %c0_81 = arith.constant 0 : index
    %c0_82 = arith.constant 0 : index
    %c112_83 = arith.constant 112 : index
    %68 = vector.load %arg1[%c0_81, %c0_82, %c112_83] : memref<1x4x256xf32, #tpu.memory_space<vmem>>, vector<1x4x16xf32>
    %69 = vector.shape_cast %68 : vector<1x4x16xf32> to vector<4x16xf32>
    %c4_84 = arith.constant 4 : index
    %c128_85 = arith.constant 128 : index
    %70 = vector.load %arg6[%c4_84, %c128_85] : memref<36x256xf32, #tpu.memory_space<vmem>>, vector<4x16xf32>
    tpu.vector_store %arg6[%c4_84, %c128_85], %69 {strides = array<i32>} : memref<36x256xf32, #tpu.memory_space<vmem>>, vector<4x16xf32>,
    %c0_86 = arith.constant 0 : index
    %c0_87 = arith.constant 0 : index
    %c128_88 = arith.constant 128 : index
    %71 = vector.load %arg1[%c0_86, %c0_87, %c128_88] : memref<1x4x256xf32, #tpu.memory_space<vmem>>, vector<1x4x16xf32>
    %72 = vector.shape_cast %71 : vector<1x4x16xf32> to vector<4x16xf32>
    %c4_89 = arith.constant 4 : index
    %c144_90 = arith.constant 144 : index
    %73 = vector.load %arg6[%c4_89, %c144_90] : memref<36x256xf32, #tpu.memory_space<vmem>>, vector<4x16xf32>
    tpu.vector_store %arg6[%c4_89, %c144_90], %72 {strides = array<i32>} : memref<36x256xf32, #tpu.memory_space<vmem>>, vector<4x16xf32>,
    %c0_91 = arith.constant 0 : index
    %c0_92 = arith.constant 0 : index
    %c144_93 = arith.constant 144 : index
    %74 = vector.load %arg1[%c0_91, %c0_92, %c144_93] : memref<1x4x256xf32, #tpu.memory_space<vmem>>, vector<1x4x16xf32>
    %75 = vector.shape_cast %74 : vector<1x4x16xf32> to vector<4x16xf32>
    %c4_94 = arith.constant 4 : index
    %c160_95 = arith.constant 160 : index
    %76 = vector.load %arg6[%c4_94, %c160_95] : memref<36x256xf32, #tpu.memory_space<vmem>>, vector<4x16xf32>
    tpu.vector_store %arg6[%c4_94, %c160_95], %75 {strides = array<i32>} : memref<36x256xf32, #tpu.memory_space<vmem>>, vector<4x16xf32>,
    %c0_96 = arith.constant 0 : index
    %c0_97 = arith.constant 0 : index
    %c160_98 = arith.constant 160 : index
    %77 = vector.load %arg1[%c0_96, %c0_97, %c160_98] : memref<1x4x256xf32, #tpu.memory_space<vmem>>, vector<1x4x16xf32>
    %78 = vector.shape_cast %77 : vector<1x4x16xf32> to vector<4x16xf32>
    %c4_99 = arith.constant 4 : index
    %c176_100 = arith.constant 176 : index
    %79 = vector.load %arg6[%c4_99, %c176_100] : memref<36x256xf32, #tpu.memory_space<vmem>>, vector<4x16xf32>
    tpu.vector_store %arg6[%c4_99, %c176_100], %78 {strides = array<i32>} : memref<36x256xf32, #tpu.memory_space<vmem>>, vector<4x16xf32>,
    %c0_101 = arith.constant 0 : index
    %c0_102 = arith.constant 0 : index
    %c176_103 = arith.constant 176 : index
    %80 = vector.load %arg1[%c0_101, %c0_102, %c176_103] : memref<1x4x256xf32, #tpu.memory_space<vmem>>, vector<1x4x16xf32>
    %81 = vector.shape_cast %80 : vector<1x4x16xf32> to vector<4x16xf32>
    %c4_104 = arith.constant 4 : index
    %c192_105 = arith.constant 192 : index
    %82 = vector.load %arg6[%c4_104, %c192_105] : memref<36x256xf32, #tpu.memory_space<vmem>>, vector<4x16xf32>
    tpu.vector_store %arg6[%c4_104, %c192_105], %81 {strides = array<i32>} : memref<36x256xf32, #tpu.memory_space<vmem>>, vector<4x16xf32>,
    %c0_106 = arith.constant 0 : index
    %c0_107 = arith.constant 0 : index
    %c192_108 = arith.constant 192 : index
    %83 = vector.load %arg1[%c0_106, %c0_107, %c192_108] : memref<1x4x256xf32, #tpu.memory_space<vmem>>, vector<1x4x16xf32>
    %84 = vector.shape_cast %83 : vector<1x4x16xf32> to vector<4x16xf32>
    %c4_109 = arith.constant 4 : index
    %c208_110 = arith.constant 208 : index
    %85 = vector.load %arg6[%c4_109, %c208_110] : memref<36x256xf32, #tpu.memory_space<vmem>>, vector<4x16xf32>
    tpu.vector_store %arg6[%c4_109, %c208_110], %84 {strides = array<i32>} : memref<36x256xf32, #tpu.memory_space<vmem>>, vector<4x16xf32>,
    %c0_111 = arith.constant 0 : index
    %c0_112 = arith.constant 0 : index
    %c208_113 = arith.constant 208 : index
    %86 = vector.load %arg1[%c0_111, %c0_112, %c208_113] : memref<1x4x256xf32, #tpu.memory_space<vmem>>, vector<1x4x16xf32>
    %87 = vector.shape_cast %86 : vector<1x4x16xf32> to vector<4x16xf32>
    %c4_114 = arith.constant 4 : index
    %c224_115 = arith.constant 224 : index
    %88 = vector.load %arg6[%c4_114, %c224_115] : memref<36x256xf32, #tpu.memory_space<vmem>>, vector<4x16xf32>
    tpu.vector_store %arg6[%c4_114, %c224_115], %87 {strides = array<i32>} : memref<36x256xf32, #tpu.memory_space<vmem>>, vector<4x16xf32>,
    %c0_116 = arith.constant 0 : index
    %c0_117 = arith.constant 0 : index
    %c224_118 = arith.constant 224 : index
    %89 = vector.load %arg1[%c0_116, %c0_117, %c224_118] : memref<1x4x256xf32, #tpu.memory_space<vmem>>, vector<1x4x16xf32>
    %90 = vector.shape_cast %89 : vector<1x4x16xf32> to vector<4x16xf32>
    %c4_119 = arith.constant 4 : index
    %c240 = arith.constant 240 : index
    %91 = vector.load %arg6[%c4_119, %c240] : memref<36x256xf32, #tpu.memory_space<vmem>>, vector<4x16xf32>
    tpu.vector_store %arg6[%c4_119, %c240], %90 {strides = array<i32>} : memref<36x256xf32, #tpu.memory_space<vmem>>, vector<4x16xf32>,
    %c0_120 = arith.constant 0 : index
    %c0_121 = arith.constant 0 : index
    %c1 = arith.constant 1 : index
    %92 = vector.load %arg1[%c0_120, %c0_121, %c1] : memref<1x4x256xf32, #tpu.memory_space<vmem>>, vector<1x4x15xf32>
    %93 = vector.shape_cast %92 : vector<1x4x15xf32> to vector<4x15xf32>
    %c8 = arith.constant 8 : index
    %c16_122 = arith.constant 16 : index
    %94 = vector.load %arg6[%c8, %c16_122] : memref<36x256xf32, #tpu.memory_space<vmem>>, vector<4x15xf32>
    tpu.vector_store %arg6[%c8, %c16_122], %93 {strides = array<i32>} : memref<36x256xf32, #tpu.memory_space<vmem>>, vector<4x15xf32>,
    %c0_123 = arith.constant 0 : index
    %c0_124 = arith.constant 0 : index
    %c17_125 = arith.constant 17 : index
    %95 = vector.load %arg1[%c0_123, %c0_124, %c17_125] : memref<1x4x256xf32, #tpu.memory_space<vmem>>, vector<1x4x15xf32>
    %96 = vector.shape_cast %95 : vector<1x4x15xf32> to vector<4x15xf32>
    %c8_126 = arith.constant 8 : index
    %c32_127 = arith.constant 32 : index
    %97 = vector.load %arg6[%c8_126, %c32_127] : memref<36x256xf32, #tpu.memory_space<vmem>>, vector<4x15xf32>
    tpu.vector_store %arg6[%c8_126, %c32_127], %96 {strides = array<i32>} : memref<36x256xf32, #tpu.memory_space<vmem>>, vector<4x15xf32>,
    %c0_128 = arith.constant 0 : index
    %c0_129 = arith.constant 0 : index
    %c33_130 = arith.constant 33 : index
    %98 = vector.load %arg1[%c0_128, %c0_129, %c33_130] : memref<1x4x256xf32, #tpu.memory_space<vmem>>, vector<1x4x15xf32>
    %99 = vector.shape_cast %98 : vector<1x4x15xf32> to vector<4x15xf32>
    %c8_131 = arith.constant 8 : index
    %c48_132 = arith.constant 48 : index
    %100 = vector.load %arg6[%c8_131, %c48_132] : memref<36x256xf32, #tpu.memory_space<vmem>>, vector<4x15xf32>
    tpu.vector_store %arg6[%c8_131, %c48_132], %99 {strides = array<i32>} : memref<36x256xf32, #tpu.memory_space<vmem>>, vector<4x15xf32>,
    %c0_133 = arith.constant 0 : index
    %c0_134 = arith.constant 0 : index
    %c49_135 = arith.constant 49 : index
    %101 = vector.load %arg1[%c0_133, %c0_134, %c49_135] : memref<1x4x256xf32, #tpu.memory_space<vmem>>, vector<1x4x15xf32>
    %102 = vector.shape_cast %101 : vector<1x4x15xf32> to vector<4x15xf32>
    %c8_136 = arith.constant 8 : index
    %c64_137 = arith.constant 64 : index
    %103 = vector.load %arg6[%c8_136, %c64_137] : memref<36x256xf32, #tpu.memory_space<vmem>>, vector<4x15xf32>
    tpu.vector_store %arg6[%c8_136, %c64_137], %102 {strides = array<i32>} : memref<36x256xf32, #tpu.memory_space<vmem>>, vector<4x15xf32>,
    %c0_138 = arith.constant 0 : index
    %c0_139 = arith.constant 0 : index
    %c65_140 = arith.constant 65 : index
    %104 = vector.load %arg1[%c0_138, %c0_139, %c65_140] : memref<1x4x256xf32, #tpu.memory_space<vmem>>, vector<1x4x15xf32>
    %105 = vector.shape_cast %104 : vector<1x4x15xf32> to vector<4x15xf32>
    %c8_141 = arith.constant 8 : index
    %c80_142 = arith.constant 80 : index
    %106 = vector.load %arg6[%c8_141, %c80_142] : memref<36x256xf32, #tpu.memory_space<vmem>>, vector<4x15xf32>
    tpu.vector_store %arg6[%c8_141, %c80_142], %105 {strides = array<i32>} : memref<36x256xf32, #tpu.memory_space<vmem>>, vector<4x15xf32>,
    %c0_143 = arith.constant 0 : index
    %c0_144 = arith.constant 0 : index
    %c81_145 = arith.constant 81 : index
    %107 = vector.load %arg1[%c0_143, %c0_144, %c81_145] : memref<1x4x256xf32, #tpu.memory_space<vmem>>, vector<1x4x15xf32>
    %108 = vector.shape_cast %107 : vector<1x4x15xf32> to vector<4x15xf32>
    %c8_146 = arith.constant 8 : index
    %c96_147 = arith.constant 96 : index
    %109 = vector.load %arg6[%c8_146, %c96_147] : memref<36x256xf32, #tpu.memory_space<vmem>>, vector<4x15xf32>
    tpu.vector_store %arg6[%c8_146, %c96_147], %108 {strides = array<i32>} : memref<36x256xf32, #tpu.memory_space<vmem>>, vector<4x15xf32>,
    %c0_148 = arith.constant 0 : index
    %c0_149 = arith.constant 0 : index
    %c97_150 = arith.constant 97 : index
    %110 = vector.load %arg1[%c0_148, %c0_149, %c97_150] : memref<1x4x256xf32, #tpu.memory_space<vmem>>, vector<1x4x15xf32>
    %111 = vector.shape_cast %110 : vector<1x4x15xf32> to vector<4x15xf32>
    %c8_151 = arith.constant 8 : index
    %c112_152 = arith.constant 112 : index
    %112 = vector.load %arg6[%c8_151, %c112_152] : memref<36x256xf32, #tpu.memory_space<vmem>>, vector<4x15xf32>
    tpu.vector_store %arg6[%c8_151, %c112_152], %111 {strides = array<i32>} : memref<36x256xf32, #tpu.memory_space<vmem>>, vector<4x15xf32>,
    %c0_153 = arith.constant 0 : index
    %c0_154 = arith.constant 0 : index
    %c113_155 = arith.constant 113 : index
    %113 = vector.load %arg1[%c0_153, %c0_154, %c113_155] : memref<1x4x256xf32, #tpu.memory_space<vmem>>, vector<1x4x15xf32>
    %114 = vector.shape_cast %113 : vector<1x4x15xf32> to vector<4x15xf32>
    %c8_156 = arith.constant 8 : index
    %c128_157 = arith.constant 128 : index
    %115 = vector.load %arg6[%c8_156, %c128_157] : memref<36x256xf32, #tpu.memory_space<vmem>>, vector<4x15xf32>
    tpu.vector_store %arg6[%c8_156, %c128_157], %114 {strides = array<i32>} : memref<36x256xf32, #tpu.memory_space<vmem>>, vector<4x15xf32>,
    %c0_158 = arith.constant 0 : index
    %c0_159 = arith.constant 0 : index
    %c129_160 = arith.constant 129 : index
    %116 = vector.load %arg1[%c0_158, %c0_159, %c129_160] : memref<1x4x256xf32, #tpu.memory_space<vmem>>, vector<1x4x15xf32>
    %117 = vector.shape_cast %116 : vector<1x4x15xf32> to vector<4x15xf32>
    %c8_161 = arith.constant 8 : index
    %c144_162 = arith.constant 144 : index
    %118 = vector.load %arg6[%c8_161, %c144_162] : memref<36x256xf32, #tpu.memory_space<vmem>>, vector<4x15xf32>
    tpu.vector_store %arg6[%c8_161, %c144_162], %117 {strides = array<i32>} : memref<36x256xf32, #tpu.memory_space<vmem>>, vector<4x15xf32>,
    %c0_163 = arith.constant 0 : index
    %c0_164 = arith.constant 0 : index
    %c145_165 = arith.constant 145 : index
    %119 = vector.load %arg1[%c0_163, %c0_164, %c145_165] : memref<1x4x256xf32, #tpu.memory_space<vmem>>, vector<1x4x15xf32>
    %120 = vector.shape_cast %119 : vector<1x4x15xf32> to vector<4x15xf32>
    %c8_166 = arith.constant 8 : index
    %c160_167 = arith.constant 160 : index
    %121 = vector.load %arg6[%c8_166, %c160_167] : memref<36x256xf32, #tpu.memory_space<vmem>>, vector<4x15xf32>
    tpu.vector_store %arg6[%c8_166, %c160_167], %120 {strides = array<i32>} : memref<36x256xf32, #tpu.memory_space<vmem>>, vector<4x15xf32>,
    %c0_168 = arith.constant 0 : index
    %c0_169 = arith.constant 0 : index
    %c161_170 = arith.constant 161 : index
    %122 = vector.load %arg1[%c0_168, %c0_169, %c161_170] : memref<1x4x256xf32, #tpu.memory_space<vmem>>, vector<1x4x15xf32>
    %123 = vector.shape_cast %122 : vector<1x4x15xf32> to vector<4x15xf32>
    %c8_171 = arith.constant 8 : index
    %c176_172 = arith.constant 176 : index
    %124 = vector.load %arg6[%c8_171, %c176_172] : memref<36x256xf32, #tpu.memory_space<vmem>>, vector<4x15xf32>
    tpu.vector_store %arg6[%c8_171, %c176_172], %123 {strides = array<i32>} : memref<36x256xf32, #tpu.memory_space<vmem>>, vector<4x15xf32>,
    %c0_173 = arith.constant 0 : index
    %c0_174 = arith.constant 0 : index
    %c177_175 = arith.constant 177 : index
    %125 = vector.load %arg1[%c0_173, %c0_174, %c177_175] : memref<1x4x256xf32, #tpu.memory_space<vmem>>, vector<1x4x15xf32>
    %126 = vector.shape_cast %125 : vector<1x4x15xf32> to vector<4x15xf32>
    %c8_176 = arith.constant 8 : index
    %c192_177 = arith.constant 192 : index
    %127 = vector.load %arg6[%c8_176, %c192_177] : memref<36x256xf32, #tpu.memory_space<vmem>>, vector<4x15xf32>
    tpu.vector_store %arg6[%c8_176, %c192_177], %126 {strides = array<i32>} : memref<36x256xf32, #tpu.memory_space<vmem>>, vector<4x15xf32>,
    %c0_178 = arith.constant 0 : index
    %c0_179 = arith.constant 0 : index
    %c193_180 = arith.constant 193 : index
    %128 = vector.load %arg1[%c0_178, %c0_179, %c193_180] : memref<1x4x256xf32, #tpu.memory_space<vmem>>, vector<1x4x15xf32>
    %129 = vector.shape_cast %128 : vector<1x4x15xf32> to vector<4x15xf32>
    %c8_181 = arith.constant 8 : index
    %c208_182 = arith.constant 208 : index
    %130 = vector.load %arg6[%c8_181, %c208_182] : memref<36x256xf32, #tpu.memory_space<vmem>>, vector<4x15xf32>
    tpu.vector_store %arg6[%c8_181, %c208_182], %129 {strides = array<i32>} : memref<36x256xf32, #tpu.memory_space<vmem>>, vector<4x15xf32>,
    %c0_183 = arith.constant 0 : index
    %c0_184 = arith.constant 0 : index
    %c209_185 = arith.constant 209 : index
    %131 = vector.load %arg1[%c0_183, %c0_184, %c209_185] : memref<1x4x256xf32, #tpu.memory_space<vmem>>, vector<1x4x15xf32>
    %132 = vector.shape_cast %131 : vector<1x4x15xf32> to vector<4x15xf32>
    %c8_186 = arith.constant 8 : index
    %c224_187 = arith.constant 224 : index
    %133 = vector.load %arg6[%c8_186, %c224_187] : memref<36x256xf32, #tpu.memory_space<vmem>>, vector<4x15xf32>
    tpu.vector_store %arg6[%c8_186, %c224_187], %132 {strides = array<i32>} : memref<36x256xf32, #tpu.memory_space<vmem>>, vector<4x15xf32>,
    %c0_188 = arith.constant 0 : index
    %c0_189 = arith.constant 0 : index
    %c225_190 = arith.constant 225 : index
    %134 = vector.load %arg1[%c0_188, %c0_189, %c225_190] : memref<1x4x256xf32, #tpu.memory_space<vmem>>, vector<1x4x15xf32>
    %135 = vector.shape_cast %134 : vector<1x4x15xf32> to vector<4x15xf32>
    %c8_191 = arith.constant 8 : index
    %c240_192 = arith.constant 240 : index
    %136 = vector.load %arg6[%c8_191, %c240_192] : memref<36x256xf32, #tpu.memory_space<vmem>>, vector<4x15xf32>
    tpu.vector_store %arg6[%c8_191, %c240_192], %135 {strides = array<i32>} : memref<36x256xf32, #tpu.memory_space<vmem>>, vector<4x15xf32>,
    %c0_193 = arith.constant 0 : index
    %c0_194 = arith.constant 0 : index
    %c0_195 = arith.constant 0 : index
    %137 = vector.load %arg1[%c0_193, %c0_194, %c0_195] : memref<1x4x256xf32, #tpu.memory_space<vmem>>, vector<1x4x15xf32>
    %138 = vector.shape_cast %137 : vector<1x4x15xf32> to vector<4x15xf32>
    %c12 = arith.constant 12 : index
    %c1_196 = arith.constant 1 : index
    %139 = vector.load %arg6[%c12, %c1_196] : memref<36x256xf32, #tpu.memory_space<vmem>>, vector<4x15xf32>
    tpu.vector_store %arg6[%c12, %c1_196], %138 {strides = array<i32>} : memref<36x256xf32, #tpu.memory_space<vmem>>, vector<4x15xf32>,
    %c0_197 = arith.constant 0 : index
    %c0_198 = arith.constant 0 : index
    %c16_199 = arith.constant 16 : index
    %140 = vector.load %arg1[%c0_197, %c0_198, %c16_199] : memref<1x4x256xf32, #tpu.memory_space<vmem>>, vector<1x4x15xf32>
    %141 = vector.shape_cast %140 : vector<1x4x15xf32> to vector<4x15xf32>
    %c12_200 = arith.constant 12 : index
    %c17_201 = arith.constant 17 : index
    %142 = vector.load %arg6[%c12_200, %c17_201] : memref<36x256xf32, #tpu.memory_space<vmem>>, vector<4x15xf32>
    tpu.vector_store %arg6[%c12_200, %c17_201], %141 {strides = array<i32>} : memref<36x256xf32, #tpu.memory_space<vmem>>, vector<4x15xf32>,
    %c0_202 = arith.constant 0 : index
    %c0_203 = arith.constant 0 : index
    %c32_204 = arith.constant 32 : index
    %143 = vector.load %arg1[%c0_202, %c0_203, %c32_204] : memref<1x4x256xf32, #tpu.memory_space<vmem>>, vector<1x4x15xf32>
    %144 = vector.shape_cast %143 : vector<1x4x15xf32> to vector<4x15xf32>
    %c12_205 = arith.constant 12 : index
    %c33_206 = arith.constant 33 : index
    %145 = vector.load %arg6[%c12_205, %c33_206] : memref<36x256xf32, #tpu.memory_space<vmem>>, vector<4x15xf32>
    tpu.vector_store %arg6[%c12_205, %c33_206], %144 {strides = array<i32>} : memref<36x256xf32, #tpu.memory_space<vmem>>, vector<4x15xf32>,
    %c0_207 = arith.constant 0 : index
    %c0_208 = arith.constant 0 : index
    %c48_209 = arith.constant 48 : index
    %146 = vector.load %arg1[%c0_207, %c0_208, %c48_209] : memref<1x4x256xf32, #tpu.memory_space<vmem>>, vector<1x4x15xf32>
    %147 = vector.shape_cast %146 : vector<1x4x15xf32> to vector<4x15xf32>
    %c12_210 = arith.constant 12 : index
    %c49_211 = arith.constant 49 : index
    %148 = vector.load %arg6[%c12_210, %c49_211] : memref<36x256xf32, #tpu.memory_space<vmem>>, vector<4x15xf32>
    tpu.vector_store %arg6[%c12_210, %c49_211], %147 {strides = array<i32>} : memref<36x256xf32, #tpu.memory_space<vmem>>, vector<4x15xf32>,
    %c0_212 = arith.constant 0 : index
    %c0_213 = arith.constant 0 : index
    %c64_214 = arith.constant 64 : index
    %149 = vector.load %arg1[%c0_212, %c0_213, %c64_214] : memref<1x4x256xf32, #tpu.memory_space<vmem>>, vector<1x4x15xf32>
    %150 = vector.shape_cast %149 : vector<1x4x15xf32> to vector<4x15xf32>
    %c12_215 = arith.constant 12 : index
    %c65_216 = arith.constant 65 : index
    %151 = vector.load %arg6[%c12_215, %c65_216] : memref<36x256xf32, #tpu.memory_space<vmem>>, vector<4x15xf32>
    tpu.vector_store %arg6[%c12_215, %c65_216], %150 {strides = array<i32>} : memref<36x256xf32, #tpu.memory_space<vmem>>, vector<4x15xf32>,
    %c0_217 = arith.constant 0 : index
    %c0_218 = arith.constant 0 : index
    %c80_219 = arith.constant 80 : index
    %152 = vector.load %arg1[%c0_217, %c0_218, %c80_219] : memref<1x4x256xf32, #tpu.memory_space<vmem>>, vector<1x4x15xf32>
    %153 = vector.shape_cast %152 : vector<1x4x15xf32> to vector<4x15xf32>
    %c12_220 = arith.constant 12 : index
    %c81_221 = arith.constant 81 : index
    %154 = vector.load %arg6[%c12_220, %c81_221] : memref<36x256xf32, #tpu.memory_space<vmem>>, vector<4x15xf32>
    tpu.vector_store %arg6[%c12_220, %c81_221], %153 {strides = array<i32>} : memref<36x256xf32, #tpu.memory_space<vmem>>, vector<4x15xf32>,
    %c0_222 = arith.constant 0 : index
    %c0_223 = arith.constant 0 : index
    %c96_224 = arith.constant 96 : index
    %155 = vector.load %arg1[%c0_222, %c0_223, %c96_224] : memref<1x4x256xf32, #tpu.memory_space<vmem>>, vector<1x4x15xf32>
    %156 = vector.shape_cast %155 : vector<1x4x15xf32> to vector<4x15xf32>
    %c12_225 = arith.constant 12 : index
    %c97_226 = arith.constant 97 : index
    %157 = vector.load %arg6[%c12_225, %c97_226] : memref<36x256xf32, #tpu.memory_space<vmem>>, vector<4x15xf32>
    tpu.vector_store %arg6[%c12_225, %c97_226], %156 {strides = array<i32>} : memref<36x256xf32, #tpu.memory_space<vmem>>, vector<4x15xf32>,
    %c0_227 = arith.constant 0 : index
    %c0_228 = arith.constant 0 : index
    %c112_229 = arith.constant 112 : index
    %158 = vector.load %arg1[%c0_227, %c0_228, %c112_229] : memref<1x4x256xf32, #tpu.memory_space<vmem>>, vector<1x4x15xf32>
    %159 = vector.shape_cast %158 : vector<1x4x15xf32> to vector<4x15xf32>
    %c12_230 = arith.constant 12 : index
    %c113_231 = arith.constant 113 : index
    %160 = vector.load %arg6[%c12_230, %c113_231] : memref<36x256xf32, #tpu.memory_space<vmem>>, vector<4x15xf32>
    tpu.vector_store %arg6[%c12_230, %c113_231], %159 {strides = array<i32>} : memref<36x256xf32, #tpu.memory_space<vmem>>, vector<4x15xf32>,
    %c0_232 = arith.constant 0 : index
    %c0_233 = arith.constant 0 : index
    %c128_234 = arith.constant 128 : index
    %161 = vector.load %arg1[%c0_232, %c0_233, %c128_234] : memref<1x4x256xf32, #tpu.memory_space<vmem>>, vector<1x4x15xf32>
    %162 = vector.shape_cast %161 : vector<1x4x15xf32> to vector<4x15xf32>
    %c12_235 = arith.constant 12 : index
    %c129_236 = arith.constant 129 : index
    %163 = vector.load %arg6[%c12_235, %c129_236] : memref<36x256xf32, #tpu.memory_space<vmem>>, vector<4x15xf32>
    tpu.vector_store %arg6[%c12_235, %c129_236], %162 {strides = array<i32>} : memref<36x256xf32, #tpu.memory_space<vmem>>, vector<4x15xf32>,
    %c0_237 = arith.constant 0 : index
    %c0_238 = arith.constant 0 : index
    %c144_239 = arith.constant 144 : index
    %164 = vector.load %arg1[%c0_237, %c0_238, %c144_239] : memref<1x4x256xf32, #tpu.memory_space<vmem>>, vector<1x4x15xf32>
    %165 = vector.shape_cast %164 : vector<1x4x15xf32> to vector<4x15xf32>
    %c12_240 = arith.constant 12 : index
    %c145_241 = arith.constant 145 : index
    %166 = vector.load %arg6[%c12_240, %c145_241] : memref<36x256xf32, #tpu.memory_space<vmem>>, vector<4x15xf32>
    tpu.vector_store %arg6[%c12_240, %c145_241], %165 {strides = array<i32>} : memref<36x256xf32, #tpu.memory_space<vmem>>, vector<4x15xf32>,
    %c0_242 = arith.constant 0 : index
    %c0_243 = arith.constant 0 : index
    %c160_244 = arith.constant 160 : index
    %167 = vector.load %arg1[%c0_242, %c0_243, %c160_244] : memref<1x4x256xf32, #tpu.memory_space<vmem>>, vector<1x4x15xf32>
    %168 = vector.shape_cast %167 : vector<1x4x15xf32> to vector<4x15xf32>
    %c12_245 = arith.constant 12 : index
    %c161_246 = arith.constant 161 : index
    %169 = vector.load %arg6[%c12_245, %c161_246] : memref<36x256xf32, #tpu.memory_space<vmem>>, vector<4x15xf32>
    tpu.vector_store %arg6[%c12_245, %c161_246], %168 {strides = array<i32>} : memref<36x256xf32, #tpu.memory_space<vmem>>, vector<4x15xf32>,
    %c0_247 = arith.constant 0 : index
    %c0_248 = arith.constant 0 : index
    %c176_249 = arith.constant 176 : index
    %170 = vector.load %arg1[%c0_247, %c0_248, %c176_249] : memref<1x4x256xf32, #tpu.memory_space<vmem>>, vector<1x4x15xf32>
    %171 = vector.shape_cast %170 : vector<1x4x15xf32> to vector<4x15xf32>
    %c12_250 = arith.constant 12 : index
    %c177_251 = arith.constant 177 : index
    %172 = vector.load %arg6[%c12_250, %c177_251] : memref<36x256xf32, #tpu.memory_space<vmem>>, vector<4x15xf32>
    tpu.vector_store %arg6[%c12_250, %c177_251], %171 {strides = array<i32>} : memref<36x256xf32, #tpu.memory_space<vmem>>, vector<4x15xf32>,
    %c0_252 = arith.constant 0 : index
    %c0_253 = arith.constant 0 : index
    %c192_254 = arith.constant 192 : index
    %173 = vector.load %arg1[%c0_252, %c0_253, %c192_254] : memref<1x4x256xf32, #tpu.memory_space<vmem>>, vector<1x4x15xf32>
    %174 = vector.shape_cast %173 : vector<1x4x15xf32> to vector<4x15xf32>
    %c12_255 = arith.constant 12 : index
    %c193_256 = arith.constant 193 : index
    %175 = vector.load %arg6[%c12_255, %c193_256] : memref<36x256xf32, #tpu.memory_space<vmem>>, vector<4x15xf32>
    tpu.vector_store %arg6[%c12_255, %c193_256], %174 {strides = array<i32>} : memref<36x256xf32, #tpu.memory_space<vmem>>, vector<4x15xf32>,
    %c0_257 = arith.constant 0 : index
    %c0_258 = arith.constant 0 : index
    %c208_259 = arith.constant 208 : index
    %176 = vector.load %arg1[%c0_257, %c0_258, %c208_259] : memref<1x4x256xf32, #tpu.memory_space<vmem>>, vector<1x4x15xf32>
    %177 = vector.shape_cast %176 : vector<1x4x15xf32> to vector<4x15xf32>
    %c12_260 = arith.constant 12 : index
    %c209_261 = arith.constant 209 : index
    %178 = vector.load %arg6[%c12_260, %c209_261] : memref<36x256xf32, #tpu.memory_space<vmem>>, vector<4x15xf32>
    tpu.vector_store %arg6[%c12_260, %c209_261], %177 {strides = array<i32>} : memref<36x256xf32, #tpu.memory_space<vmem>>, vector<4x15xf32>,
    %c0_262 = arith.constant 0 : index
    %c0_263 = arith.constant 0 : index
    %c224_264 = arith.constant 224 : index
    %179 = vector.load %arg1[%c0_262, %c0_263, %c224_264] : memref<1x4x256xf32, #tpu.memory_space<vmem>>, vector<1x4x15xf32>
    %180 = vector.shape_cast %179 : vector<1x4x15xf32> to vector<4x15xf32>
    %c12_265 = arith.constant 12 : index
    %c225_266 = arith.constant 225 : index
    %181 = vector.load %arg6[%c12_265, %c225_266] : memref<36x256xf32, #tpu.memory_space<vmem>>, vector<4x15xf32>
    tpu.vector_store %arg6[%c12_265, %c225_266], %180 {strides = array<i32>} : memref<36x256xf32, #tpu.memory_space<vmem>>, vector<4x15xf32>,
    %c0_267 = arith.constant 0 : index
    %c0_268 = arith.constant 0 : index
    %c240_269 = arith.constant 240 : index
    %182 = vector.load %arg1[%c0_267, %c0_268, %c240_269] : memref<1x4x256xf32, #tpu.memory_space<vmem>>, vector<1x4x15xf32>
    %183 = vector.shape_cast %182 : vector<1x4x15xf32> to vector<4x15xf32>
    %c12_270 = arith.constant 12 : index
    %c241_271 = arith.constant 241 : index
    %184 = vector.load %arg6[%c12_270, %c241_271] : memref<36x256xf32, #tpu.memory_space<vmem>>, vector<4x15xf32>
    tpu.vector_store %arg6[%c12_270, %c241_271], %183 {strides = array<i32>} : memref<36x256xf32, #tpu.memory_space<vmem>>, vector<4x15xf32>,
    %c0_272 = arith.constant 0 : index
    %c0_273 = arith.constant 0 : index
    %c0_274 = arith.constant 0 : index
    %185 = vector.load %arg1[%c0_272, %c0_273, %c0_274] : memref<1x4x256xf32, #tpu.memory_space<vmem>>, vector<1x4x16xf32>
    %186 = vector.shape_cast %185 : vector<1x4x16xf32> to vector<4x16xf32>
    %c16_275 = arith.constant 16 : index
    %c0_276 = arith.constant 0 : index
    %187 = vector.load %arg6[%c16_275, %c0_276] : memref<36x256xf32, #tpu.memory_space<vmem>>, vector<4x16xf32>
    tpu.vector_store %arg6[%c16_275, %c0_276], %186 {strides = array<i32>} : memref<36x256xf32, #tpu.memory_space<vmem>>, vector<4x16xf32>,
    %c0_277 = arith.constant 0 : index
    %c0_278 = arith.constant 0 : index
    %c16_279 = arith.constant 16 : index
    %188 = vector.load %arg1[%c0_277, %c0_278, %c16_279] : memref<1x4x256xf32, #tpu.memory_space<vmem>>, vector<1x4x16xf32>
    %189 = vector.shape_cast %188 : vector<1x4x16xf32> to vector<4x16xf32>
    %c16_280 = arith.constant 16 : index
    %c16_281 = arith.constant 16 : index
    %190 = vector.load %arg6[%c16_280, %c16_281] : memref<36x256xf32, #tpu.memory_space<vmem>>, vector<4x16xf32>
    tpu.vector_store %arg6[%c16_280, %c16_281], %189 {strides = array<i32>} : memref<36x256xf32, #tpu.memory_space<vmem>>, vector<4x16xf32>,
    %c0_282 = arith.constant 0 : index
    %c0_283 = arith.constant 0 : index
    %c32_284 = arith.constant 32 : index
    %191 = vector.load %arg1[%c0_282, %c0_283, %c32_284] : memref<1x4x256xf32, #tpu.memory_space<vmem>>, vector<1x4x16xf32>
    %192 = vector.shape_cast %191 : vector<1x4x16xf32> to vector<4x16xf32>
    %c16_285 = arith.constant 16 : index
    %c32_286 = arith.constant 32 : index
    %193 = vector.load %arg6[%c16_285, %c32_286] : memref<36x256xf32, #tpu.memory_space<vmem>>, vector<4x16xf32>
    tpu.vector_store %arg6[%c16_285, %c32_286], %192 {strides = array<i32>} : memref<36x256xf32, #tpu.memory_space<vmem>>, vector<4x16xf32>,
    %c0_287 = arith.constant 0 : index
    %c0_288 = arith.constant 0 : index
    %c48_289 = arith.constant 48 : index
    %194 = vector.load %arg1[%c0_287, %c0_288, %c48_289] : memref<1x4x256xf32, #tpu.memory_space<vmem>>, vector<1x4x16xf32>
    %195 = vector.shape_cast %194 : vector<1x4x16xf32> to vector<4x16xf32>
    %c16_290 = arith.constant 16 : index
    %c48_291 = arith.constant 48 : index
    %196 = vector.load %arg6[%c16_290, %c48_291] : memref<36x256xf32, #tpu.memory_space<vmem>>, vector<4x16xf32>
    tpu.vector_store %arg6[%c16_290, %c48_291], %195 {strides = array<i32>} : memref<36x256xf32, #tpu.memory_space<vmem>>, vector<4x16xf32>,
    %c0_292 = arith.constant 0 : index
    %c0_293 = arith.constant 0 : index
    %c64_294 = arith.constant 64 : index
    %197 = vector.load %arg1[%c0_292, %c0_293, %c64_294] : memref<1x4x256xf32, #tpu.memory_space<vmem>>, vector<1x4x16xf32>
    %198 = vector.shape_cast %197 : vector<1x4x16xf32> to vector<4x16xf32>
    %c16_295 = arith.constant 16 : index
    %c64_296 = arith.constant 64 : index
    %199 = vector.load %arg6[%c16_295, %c64_296] : memref<36x256xf32, #tpu.memory_space<vmem>>, vector<4x16xf32>
    tpu.vector_store %arg6[%c16_295, %c64_296], %198 {strides = array<i32>} : memref<36x256xf32, #tpu.memory_space<vmem>>, vector<4x16xf32>,
    %c0_297 = arith.constant 0 : index
    %c0_298 = arith.constant 0 : index
    %c80_299 = arith.constant 80 : index
    %200 = vector.load %arg1[%c0_297, %c0_298, %c80_299] : memref<1x4x256xf32, #tpu.memory_space<vmem>>, vector<1x4x16xf32>
    %201 = vector.shape_cast %200 : vector<1x4x16xf32> to vector<4x16xf32>
    %c16_300 = arith.constant 16 : index
    %c80_301 = arith.constant 80 : index
    %202 = vector.load %arg6[%c16_300, %c80_301] : memref<36x256xf32, #tpu.memory_space<vmem>>, vector<4x16xf32>
    tpu.vector_store %arg6[%c16_300, %c80_301], %201 {strides = array<i32>} : memref<36x256xf32, #tpu.memory_space<vmem>>, vector<4x16xf32>,
    %c0_302 = arith.constant 0 : index
    %c0_303 = arith.constant 0 : index
    %c96_304 = arith.constant 96 : index
    %203 = vector.load %arg1[%c0_302, %c0_303, %c96_304] : memref<1x4x256xf32, #tpu.memory_space<vmem>>, vector<1x4x16xf32>
    %204 = vector.shape_cast %203 : vector<1x4x16xf32> to vector<4x16xf32>
    %c16_305 = arith.constant 16 : index
    %c96_306 = arith.constant 96 : index
    %205 = vector.load %arg6[%c16_305, %c96_306] : memref<36x256xf32, #tpu.memory_space<vmem>>, vector<4x16xf32>
    tpu.vector_store %arg6[%c16_305, %c96_306], %204 {strides = array<i32>} : memref<36x256xf32, #tpu.memory_space<vmem>>, vector<4x16xf32>,
    %c0_307 = arith.constant 0 : index
    %c0_308 = arith.constant 0 : index
    %c112_309 = arith.constant 112 : index
    %206 = vector.load %arg1[%c0_307, %c0_308, %c112_309] : memref<1x4x256xf32, #tpu.memory_space<vmem>>, vector<1x4x16xf32>
    %207 = vector.shape_cast %206 : vector<1x4x16xf32> to vector<4x16xf32>
    %c16_310 = arith.constant 16 : index
    %c112_311 = arith.constant 112 : index
    %208 = vector.load %arg6[%c16_310, %c112_311] : memref<36x256xf32, #tpu.memory_space<vmem>>, vector<4x16xf32>
    tpu.vector_store %arg6[%c16_310, %c112_311], %207 {strides = array<i32>} : memref<36x256xf32, #tpu.memory_space<vmem>>, vector<4x16xf32>,
    %c0_312 = arith.constant 0 : index
    %c0_313 = arith.constant 0 : index
    %c128_314 = arith.constant 128 : index
    %209 = vector.load %arg1[%c0_312, %c0_313, %c128_314] : memref<1x4x256xf32, #tpu.memory_space<vmem>>, vector<1x4x16xf32>
    %210 = vector.shape_cast %209 : vector<1x4x16xf32> to vector<4x16xf32>
    %c16_315 = arith.constant 16 : index
    %c128_316 = arith.constant 128 : index
    %211 = vector.load %arg6[%c16_315, %c128_316] : memref<36x256xf32, #tpu.memory_space<vmem>>, vector<4x16xf32>
    tpu.vector_store %arg6[%c16_315, %c128_316], %210 {strides = array<i32>} : memref<36x256xf32, #tpu.memory_space<vmem>>, vector<4x16xf32>,
    %c0_317 = arith.constant 0 : index
    %c0_318 = arith.constant 0 : index
    %c144_319 = arith.constant 144 : index
    %212 = vector.load %arg1[%c0_317, %c0_318, %c144_319] : memref<1x4x256xf32, #tpu.memory_space<vmem>>, vector<1x4x16xf32>
    %213 = vector.shape_cast %212 : vector<1x4x16xf32> to vector<4x16xf32>
    %c16_320 = arith.constant 16 : index
    %c144_321 = arith.constant 144 : index
    %214 = vector.load %arg6[%c16_320, %c144_321] : memref<36x256xf32, #tpu.memory_space<vmem>>, vector<4x16xf32>
    tpu.vector_store %arg6[%c16_320, %c144_321], %213 {strides = array<i32>} : memref<36x256xf32, #tpu.memory_space<vmem>>, vector<4x16xf32>,
    %c0_322 = arith.constant 0 : index
    %c0_323 = arith.constant 0 : index
    %c160_324 = arith.constant 160 : index
    %215 = vector.load %arg1[%c0_322, %c0_323, %c160_324] : memref<1x4x256xf32, #tpu.memory_space<vmem>>, vector<1x4x16xf32>
    %216 = vector.shape_cast %215 : vector<1x4x16xf32> to vector<4x16xf32>
    %c16_325 = arith.constant 16 : index
    %c160_326 = arith.constant 160 : index
    %217 = vector.load %arg6[%c16_325, %c160_326] : memref<36x256xf32, #tpu.memory_space<vmem>>, vector<4x16xf32>
    tpu.vector_store %arg6[%c16_325, %c160_326], %216 {strides = array<i32>} : memref<36x256xf32, #tpu.memory_space<vmem>>, vector<4x16xf32>,
    %c0_327 = arith.constant 0 : index
    %c0_328 = arith.constant 0 : index
    %c176_329 = arith.constant 176 : index
    %218 = vector.load %arg1[%c0_327, %c0_328, %c176_329] : memref<1x4x256xf32, #tpu.memory_space<vmem>>, vector<1x4x16xf32>
    %219 = vector.shape_cast %218 : vector<1x4x16xf32> to vector<4x16xf32>
    %c16_330 = arith.constant 16 : index
    %c176_331 = arith.constant 176 : index
    %220 = vector.load %arg6[%c16_330, %c176_331] : memref<36x256xf32, #tpu.memory_space<vmem>>, vector<4x16xf32>
    tpu.vector_store %arg6[%c16_330, %c176_331], %219 {strides = array<i32>} : memref<36x256xf32, #tpu.memory_space<vmem>>, vector<4x16xf32>,
    %c0_332 = arith.constant 0 : index
    %c0_333 = arith.constant 0 : index
    %c192_334 = arith.constant 192 : index
    %221 = vector.load %arg1[%c0_332, %c0_333, %c192_334] : memref<1x4x256xf32, #tpu.memory_space<vmem>>, vector<1x4x16xf32>
    %222 = vector.shape_cast %221 : vector<1x4x16xf32> to vector<4x16xf32>
    %c16_335 = arith.constant 16 : index
    %c192_336 = arith.constant 192 : index
    %223 = vector.load %arg6[%c16_335, %c192_336] : memref<36x256xf32, #tpu.memory_space<vmem>>, vector<4x16xf32>
    tpu.vector_store %arg6[%c16_335, %c192_336], %222 {strides = array<i32>} : memref<36x256xf32, #tpu.memory_space<vmem>>, vector<4x16xf32>,
    %c0_337 = arith.constant 0 : index
    %c0_338 = arith.constant 0 : index
    %c208_339 = arith.constant 208 : index
    %224 = vector.load %arg1[%c0_337, %c0_338, %c208_339] : memref<1x4x256xf32, #tpu.memory_space<vmem>>, vector<1x4x16xf32>
    %225 = vector.shape_cast %224 : vector<1x4x16xf32> to vector<4x16xf32>
    %c16_340 = arith.constant 16 : index
    %c208_341 = arith.constant 208 : index
    %226 = vector.load %arg6[%c16_340, %c208_341] : memref<36x256xf32, #tpu.memory_space<vmem>>, vector<4x16xf32>
    tpu.vector_store %arg6[%c16_340, %c208_341], %225 {strides = array<i32>} : memref<36x256xf32, #tpu.memory_space<vmem>>, vector<4x16xf32>,
    %c0_342 = arith.constant 0 : index
    %c0_343 = arith.constant 0 : index
    %c224_344 = arith.constant 224 : index
    %227 = vector.load %arg1[%c0_342, %c0_343, %c224_344] : memref<1x4x256xf32, #tpu.memory_space<vmem>>, vector<1x4x16xf32>
    %228 = vector.shape_cast %227 : vector<1x4x16xf32> to vector<4x16xf32>
    %c16_345 = arith.constant 16 : index
    %c224_346 = arith.constant 224 : index
    %229 = vector.load %arg6[%c16_345, %c224_346] : memref<36x256xf32, #tpu.memory_space<vmem>>, vector<4x16xf32>
    tpu.vector_store %arg6[%c16_345, %c224_346], %228 {strides = array<i32>} : memref<36x256xf32, #tpu.memory_space<vmem>>, vector<4x16xf32>,
    %c0_347 = arith.constant 0 : index
    %c0_348 = arith.constant 0 : index
    %c240_349 = arith.constant 240 : index
    %230 = vector.load %arg1[%c0_347, %c0_348, %c240_349] : memref<1x4x256xf32, #tpu.memory_space<vmem>>, vector<1x4x16xf32>
    %231 = vector.shape_cast %230 : vector<1x4x16xf32> to vector<4x16xf32>
    %c16_350 = arith.constant 16 : index
    %c240_351 = arith.constant 240 : index
    %232 = vector.load %arg6[%c16_350, %c240_351] : memref<36x256xf32, #tpu.memory_space<vmem>>, vector<4x16xf32>
    tpu.vector_store %arg6[%c16_350, %c240_351], %231 {strides = array<i32>} : memref<36x256xf32, #tpu.memory_space<vmem>>, vector<4x16xf32>,
    %c0_352 = arith.constant 0 : index
    %c0_353 = arith.constant 0 : index
    %c1_354 = arith.constant 1 : index
    %233 = vector.load %arg1[%c0_352, %c0_353, %c1_354] : memref<1x4x256xf32, #tpu.memory_space<vmem>>, vector<1x4x15xf32>
    %234 = vector.shape_cast %233 : vector<1x4x15xf32> to vector<4x15xf32>
    %c20 = arith.constant 20 : index
    %c0_355 = arith.constant 0 : index
    %235 = vector.load %arg6[%c20, %c0_355] : memref<36x256xf32, #tpu.memory_space<vmem>>, vector<4x15xf32>
    tpu.vector_store %arg6[%c20, %c0_355], %234 {strides = array<i32>} : memref<36x256xf32, #tpu.memory_space<vmem>>, vector<4x15xf32>,
    %c0_356 = arith.constant 0 : index
    %c0_357 = arith.constant 0 : index
    %c17_358 = arith.constant 17 : index
    %236 = vector.load %arg1[%c0_356, %c0_357, %c17_358] : memref<1x4x256xf32, #tpu.memory_space<vmem>>, vector<1x4x15xf32>
    %237 = vector.shape_cast %236 : vector<1x4x15xf32> to vector<4x15xf32>
    %c20_359 = arith.constant 20 : index
    %c16_360 = arith.constant 16 : index
    %238 = vector.load %arg6[%c20_359, %c16_360] : memref<36x256xf32, #tpu.memory_space<vmem>>, vector<4x15xf32>
    tpu.vector_store %arg6[%c20_359, %c16_360], %237 {strides = array<i32>} : memref<36x256xf32, #tpu.memory_space<vmem>>, vector<4x15xf32>,
    %c0_361 = arith.constant 0 : index
    %c0_362 = arith.constant 0 : index
    %c33_363 = arith.constant 33 : index
    %239 = vector.load %arg1[%c0_361, %c0_362, %c33_363] : memref<1x4x256xf32, #tpu.memory_space<vmem>>, vector<1x4x15xf32>
    %240 = vector.shape_cast %239 : vector<1x4x15xf32> to vector<4x15xf32>
    %c20_364 = arith.constant 20 : index
    %c32_365 = arith.constant 32 : index
    %241 = vector.load %arg6[%c20_364, %c32_365] : memref<36x256xf32, #tpu.memory_space<vmem>>, vector<4x15xf32>
    tpu.vector_store %arg6[%c20_364, %c32_365], %240 {strides = array<i32>} : memref<36x256xf32, #tpu.memory_space<vmem>>, vector<4x15xf32>,
    %c0_366 = arith.constant 0 : index
    %c0_367 = arith.constant 0 : index
    %c49_368 = arith.constant 49 : index
    %242 = vector.load %arg1[%c0_366, %c0_367, %c49_368] : memref<1x4x256xf32, #tpu.memory_space<vmem>>, vector<1x4x15xf32>
    %243 = vector.shape_cast %242 : vector<1x4x15xf32> to vector<4x15xf32>
    %c20_369 = arith.constant 20 : index
    %c48_370 = arith.constant 48 : index
    %244 = vector.load %arg6[%c20_369, %c48_370] : memref<36x256xf32, #tpu.memory_space<vmem>>, vector<4x15xf32>
    tpu.vector_store %arg6[%c20_369, %c48_370], %243 {strides = array<i32>} : memref<36x256xf32, #tpu.memory_space<vmem>>, vector<4x15xf32>,
    %c0_371 = arith.constant 0 : index
    %c0_372 = arith.constant 0 : index
    %c65_373 = arith.constant 65 : index
    %245 = vector.load %arg1[%c0_371, %c0_372, %c65_373] : memref<1x4x256xf32, #tpu.memory_space<vmem>>, vector<1x4x15xf32>
    %246 = vector.shape_cast %245 : vector<1x4x15xf32> to vector<4x15xf32>
    %c20_374 = arith.constant 20 : index
    %c64_375 = arith.constant 64 : index
    %247 = vector.load %arg6[%c20_374, %c64_375] : memref<36x256xf32, #tpu.memory_space<vmem>>, vector<4x15xf32>
    tpu.vector_store %arg6[%c20_374, %c64_375], %246 {strides = array<i32>} : memref<36x256xf32, #tpu.memory_space<vmem>>, vector<4x15xf32>,
    %c0_376 = arith.constant 0 : index
    %c0_377 = arith.constant 0 : index
    %c81_378 = arith.constant 81 : index
    %248 = vector.load %arg1[%c0_376, %c0_377, %c81_378] : memref<1x4x256xf32, #tpu.memory_space<vmem>>, vector<1x4x15xf32>
    %249 = vector.shape_cast %248 : vector<1x4x15xf32> to vector<4x15xf32>
    %c20_379 = arith.constant 20 : index
    %c80_380 = arith.constant 80 : index
    %250 = vector.load %arg6[%c20_379, %c80_380] : memref<36x256xf32, #tpu.memory_space<vmem>>, vector<4x15xf32>
    tpu.vector_store %arg6[%c20_379, %c80_380], %249 {strides = array<i32>} : memref<36x256xf32, #tpu.memory_space<vmem>>, vector<4x15xf32>,
    %c0_381 = arith.constant 0 : index
    %c0_382 = arith.constant 0 : index
    %c97_383 = arith.constant 97 : index
    %251 = vector.load %arg1[%c0_381, %c0_382, %c97_383] : memref<1x4x256xf32, #tpu.memory_space<vmem>>, vector<1x4x15xf32>
    %252 = vector.shape_cast %251 : vector<1x4x15xf32> to vector<4x15xf32>
    %c20_384 = arith.constant 20 : index
    %c96_385 = arith.constant 96 : index
    %253 = vector.load %arg6[%c20_384, %c96_385] : memref<36x256xf32, #tpu.memory_space<vmem>>, vector<4x15xf32>
    tpu.vector_store %arg6[%c20_384, %c96_385], %252 {strides = array<i32>} : memref<36x256xf32, #tpu.memory_space<vmem>>, vector<4x15xf32>,
    %c0_386 = arith.constant 0 : index
    %c0_387 = arith.constant 0 : index
    %c113_388 = arith.constant 113 : index
    %254 = vector.load %arg1[%c0_386, %c0_387, %c113_388] : memref<1x4x256xf32, #tpu.memory_space<vmem>>, vector<1x4x15xf32>
    %255 = vector.shape_cast %254 : vector<1x4x15xf32> to vector<4x15xf32>
    %c20_389 = arith.constant 20 : index
    %c112_390 = arith.constant 112 : index
    %256 = vector.load %arg6[%c20_389, %c112_390] : memref<36x256xf32, #tpu.memory_space<vmem>>, vector<4x15xf32>
    tpu.vector_store %arg6[%c20_389, %c112_390], %255 {strides = array<i32>} : memref<36x256xf32, #tpu.memory_space<vmem>>, vector<4x15xf32>,
    %c0_391 = arith.constant 0 : index
    %c0_392 = arith.constant 0 : index
    %c129_393 = arith.constant 129 : index
    %257 = vector.load %arg1[%c0_391, %c0_392, %c129_393] : memref<1x4x256xf32, #tpu.memory_space<vmem>>, vector<1x4x15xf32>
    %258 = vector.shape_cast %257 : vector<1x4x15xf32> to vector<4x15xf32>
    %c20_394 = arith.constant 20 : index
    %c128_395 = arith.constant 128 : index
    %259 = vector.load %arg6[%c20_394, %c128_395] : memref<36x256xf32, #tpu.memory_space<vmem>>, vector<4x15xf32>
    tpu.vector_store %arg6[%c20_394, %c128_395], %258 {strides = array<i32>} : memref<36x256xf32, #tpu.memory_space<vmem>>, vector<4x15xf32>,
    %c0_396 = arith.constant 0 : index
    %c0_397 = arith.constant 0 : index
    %c145_398 = arith.constant 145 : index
    %260 = vector.load %arg1[%c0_396, %c0_397, %c145_398] : memref<1x4x256xf32, #tpu.memory_space<vmem>>, vector<1x4x15xf32>
    %261 = vector.shape_cast %260 : vector<1x4x15xf32> to vector<4x15xf32>
    %c20_399 = arith.constant 20 : index
    %c144_400 = arith.constant 144 : index
    %262 = vector.load %arg6[%c20_399, %c144_400] : memref<36x256xf32, #tpu.memory_space<vmem>>, vector<4x15xf32>
    tpu.vector_store %arg6[%c20_399, %c144_400], %261 {strides = array<i32>} : memref<36x256xf32, #tpu.memory_space<vmem>>, vector<4x15xf32>,
    %c0_401 = arith.constant 0 : index
    %c0_402 = arith.constant 0 : index
    %c161_403 = arith.constant 161 : index
    %263 = vector.load %arg1[%c0_401, %c0_402, %c161_403] : memref<1x4x256xf32, #tpu.memory_space<vmem>>, vector<1x4x15xf32>
    %264 = vector.shape_cast %263 : vector<1x4x15xf32> to vector<4x15xf32>
    %c20_404 = arith.constant 20 : index
    %c160_405 = arith.constant 160 : index
    %265 = vector.load %arg6[%c20_404, %c160_405] : memref<36x256xf32, #tpu.memory_space<vmem>>, vector<4x15xf32>
    tpu.vector_store %arg6[%c20_404, %c160_405], %264 {strides = array<i32>} : memref<36x256xf32, #tpu.memory_space<vmem>>, vector<4x15xf32>,
    %c0_406 = arith.constant 0 : index
    %c0_407 = arith.constant 0 : index
    %c177_408 = arith.constant 177 : index
    %266 = vector.load %arg1[%c0_406, %c0_407, %c177_408] : memref<1x4x256xf32, #tpu.memory_space<vmem>>, vector<1x4x15xf32>
    %267 = vector.shape_cast %266 : vector<1x4x15xf32> to vector<4x15xf32>
    %c20_409 = arith.constant 20 : index
    %c176_410 = arith.constant 176 : index
    %268 = vector.load %arg6[%c20_409, %c176_410] : memref<36x256xf32, #tpu.memory_space<vmem>>, vector<4x15xf32>
    tpu.vector_store %arg6[%c20_409, %c176_410], %267 {strides = array<i32>} : memref<36x256xf32, #tpu.memory_space<vmem>>, vector<4x15xf32>,
    %c0_411 = arith.constant 0 : index
    %c0_412 = arith.constant 0 : index
    %c193_413 = arith.constant 193 : index
    %269 = vector.load %arg1[%c0_411, %c0_412, %c193_413] : memref<1x4x256xf32, #tpu.memory_space<vmem>>, vector<1x4x15xf32>
    %270 = vector.shape_cast %269 : vector<1x4x15xf32> to vector<4x15xf32>
    %c20_414 = arith.constant 20 : index
    %c192_415 = arith.constant 192 : index
    %271 = vector.load %arg6[%c20_414, %c192_415] : memref<36x256xf32, #tpu.memory_space<vmem>>, vector<4x15xf32>
    tpu.vector_store %arg6[%c20_414, %c192_415], %270 {strides = array<i32>} : memref<36x256xf32, #tpu.memory_space<vmem>>, vector<4x15xf32>,
    %c0_416 = arith.constant 0 : index
    %c0_417 = arith.constant 0 : index
    %c209_418 = arith.constant 209 : index
    %272 = vector.load %arg1[%c0_416, %c0_417, %c209_418] : memref<1x4x256xf32, #tpu.memory_space<vmem>>, vector<1x4x15xf32>
    %273 = vector.shape_cast %272 : vector<1x4x15xf32> to vector<4x15xf32>
    %c20_419 = arith.constant 20 : index
    %c208_420 = arith.constant 208 : index
    %274 = vector.load %arg6[%c20_419, %c208_420] : memref<36x256xf32, #tpu.memory_space<vmem>>, vector<4x15xf32>
    tpu.vector_store %arg6[%c20_419, %c208_420], %273 {strides = array<i32>} : memref<36x256xf32, #tpu.memory_space<vmem>>, vector<4x15xf32>,
    %c0_421 = arith.constant 0 : index
    %c0_422 = arith.constant 0 : index
    %c225_423 = arith.constant 225 : index
    %275 = vector.load %arg1[%c0_421, %c0_422, %c225_423] : memref<1x4x256xf32, #tpu.memory_space<vmem>>, vector<1x4x15xf32>
    %276 = vector.shape_cast %275 : vector<1x4x15xf32> to vector<4x15xf32>
    %c20_424 = arith.constant 20 : index
    %c224_425 = arith.constant 224 : index
    %277 = vector.load %arg6[%c20_424, %c224_425] : memref<36x256xf32, #tpu.memory_space<vmem>>, vector<4x15xf32>
    tpu.vector_store %arg6[%c20_424, %c224_425], %276 {strides = array<i32>} : memref<36x256xf32, #tpu.memory_space<vmem>>, vector<4x15xf32>,
    %c0_426 = arith.constant 0 : index
    %c0_427 = arith.constant 0 : index
    %c241_428 = arith.constant 241 : index
    %278 = vector.load %arg1[%c0_426, %c0_427, %c241_428] : memref<1x4x256xf32, #tpu.memory_space<vmem>>, vector<1x4x15xf32>
    %279 = vector.shape_cast %278 : vector<1x4x15xf32> to vector<4x15xf32>
    %c20_429 = arith.constant 20 : index
    %c240_430 = arith.constant 240 : index
    %280 = vector.load %arg6[%c20_429, %c240_430] : memref<36x256xf32, #tpu.memory_space<vmem>>, vector<4x15xf32>
    tpu.vector_store %arg6[%c20_429, %c240_430], %279 {strides = array<i32>} : memref<36x256xf32, #tpu.memory_space<vmem>>, vector<4x15xf32>,
    %c0_431 = arith.constant 0 : index
    %c0_432 = arith.constant 0 : index
    %c16_433 = arith.constant 16 : index
    %281 = vector.load %arg1[%c0_431, %c0_432, %c16_433] : memref<1x4x256xf32, #tpu.memory_space<vmem>>, vector<1x4x15xf32>
    %282 = vector.shape_cast %281 : vector<1x4x15xf32> to vector<4x15xf32>
    %c24 = arith.constant 24 : index
    %c1_434 = arith.constant 1 : index
    %283 = vector.load %arg6[%c24, %c1_434] : memref<36x256xf32, #tpu.memory_space<vmem>>, vector<4x15xf32>
    tpu.vector_store %arg6[%c24, %c1_434], %282 {strides = array<i32>} : memref<36x256xf32, #tpu.memory_space<vmem>>, vector<4x15xf32>,
    %c0_435 = arith.constant 0 : index
    %c0_436 = arith.constant 0 : index
    %c32_437 = arith.constant 32 : index
    %284 = vector.load %arg1[%c0_435, %c0_436, %c32_437] : memref<1x4x256xf32, #tpu.memory_space<vmem>>, vector<1x4x15xf32>
    %285 = vector.shape_cast %284 : vector<1x4x15xf32> to vector<4x15xf32>
    %c24_438 = arith.constant 24 : index
    %c17_439 = arith.constant 17 : index
    %286 = vector.load %arg6[%c24_438, %c17_439] : memref<36x256xf32, #tpu.memory_space<vmem>>, vector<4x15xf32>
    tpu.vector_store %arg6[%c24_438, %c17_439], %285 {strides = array<i32>} : memref<36x256xf32, #tpu.memory_space<vmem>>, vector<4x15xf32>,
    %c0_440 = arith.constant 0 : index
    %c0_441 = arith.constant 0 : index
    %c48_442 = arith.constant 48 : index
    %287 = vector.load %arg1[%c0_440, %c0_441, %c48_442] : memref<1x4x256xf32, #tpu.memory_space<vmem>>, vector<1x4x15xf32>
    %288 = vector.shape_cast %287 : vector<1x4x15xf32> to vector<4x15xf32>
    %c24_443 = arith.constant 24 : index
    %c33_444 = arith.constant 33 : index
    %289 = vector.load %arg6[%c24_443, %c33_444] : memref<36x256xf32, #tpu.memory_space<vmem>>, vector<4x15xf32>
    tpu.vector_store %arg6[%c24_443, %c33_444], %288 {strides = array<i32>} : memref<36x256xf32, #tpu.memory_space<vmem>>, vector<4x15xf32>,
    %c0_445 = arith.constant 0 : index
    %c0_446 = arith.constant 0 : index
    %c64_447 = arith.constant 64 : index
    %290 = vector.load %arg1[%c0_445, %c0_446, %c64_447] : memref<1x4x256xf32, #tpu.memory_space<vmem>>, vector<1x4x15xf32>
    %291 = vector.shape_cast %290 : vector<1x4x15xf32> to vector<4x15xf32>
    %c24_448 = arith.constant 24 : index
    %c49_449 = arith.constant 49 : index
    %292 = vector.load %arg6[%c24_448, %c49_449] : memref<36x256xf32, #tpu.memory_space<vmem>>, vector<4x15xf32>
    tpu.vector_store %arg6[%c24_448, %c49_449], %291 {strides = array<i32>} : memref<36x256xf32, #tpu.memory_space<vmem>>, vector<4x15xf32>,
    %c0_450 = arith.constant 0 : index
    %c0_451 = arith.constant 0 : index
    %c80_452 = arith.constant 80 : index
    %293 = vector.load %arg1[%c0_450, %c0_451, %c80_452] : memref<1x4x256xf32, #tpu.memory_space<vmem>>, vector<1x4x15xf32>
    %294 = vector.shape_cast %293 : vector<1x4x15xf32> to vector<4x15xf32>
    %c24_453 = arith.constant 24 : index
    %c65_454 = arith.constant 65 : index
    %295 = vector.load %arg6[%c24_453, %c65_454] : memref<36x256xf32, #tpu.memory_space<vmem>>, vector<4x15xf32>
    tpu.vector_store %arg6[%c24_453, %c65_454], %294 {strides = array<i32>} : memref<36x256xf32, #tpu.memory_space<vmem>>, vector<4x15xf32>,
    %c0_455 = arith.constant 0 : index
    %c0_456 = arith.constant 0 : index
    %c96_457 = arith.constant 96 : index
    %296 = vector.load %arg1[%c0_455, %c0_456, %c96_457] : memref<1x4x256xf32, #tpu.memory_space<vmem>>, vector<1x4x15xf32>
    %297 = vector.shape_cast %296 : vector<1x4x15xf32> to vector<4x15xf32>
    %c24_458 = arith.constant 24 : index
    %c81_459 = arith.constant 81 : index
    %298 = vector.load %arg6[%c24_458, %c81_459] : memref<36x256xf32, #tpu.memory_space<vmem>>, vector<4x15xf32>
    tpu.vector_store %arg6[%c24_458, %c81_459], %297 {strides = array<i32>} : memref<36x256xf32, #tpu.memory_space<vmem>>, vector<4x15xf32>,
    %c0_460 = arith.constant 0 : index
    %c0_461 = arith.constant 0 : index
    %c112_462 = arith.constant 112 : index
    %299 = vector.load %arg1[%c0_460, %c0_461, %c112_462] : memref<1x4x256xf32, #tpu.memory_space<vmem>>, vector<1x4x15xf32>
    %300 = vector.shape_cast %299 : vector<1x4x15xf32> to vector<4x15xf32>
    %c24_463 = arith.constant 24 : index
    %c97_464 = arith.constant 97 : index
    %301 = vector.load %arg6[%c24_463, %c97_464] : memref<36x256xf32, #tpu.memory_space<vmem>>, vector<4x15xf32>
    tpu.vector_store %arg6[%c24_463, %c97_464], %300 {strides = array<i32>} : memref<36x256xf32, #tpu.memory_space<vmem>>, vector<4x15xf32>,
    %c0_465 = arith.constant 0 : index
    %c0_466 = arith.constant 0 : index
    %c128_467 = arith.constant 128 : index
    %302 = vector.load %arg1[%c0_465, %c0_466, %c128_467] : memref<1x4x256xf32, #tpu.memory_space<vmem>>, vector<1x4x15xf32>
    %303 = vector.shape_cast %302 : vector<1x4x15xf32> to vector<4x15xf32>
    %c24_468 = arith.constant 24 : index
    %c113_469 = arith.constant 113 : index
    %304 = vector.load %arg6[%c24_468, %c113_469] : memref<36x256xf32, #tpu.memory_space<vmem>>, vector<4x15xf32>
    tpu.vector_store %arg6[%c24_468, %c113_469], %303 {strides = array<i32>} : memref<36x256xf32, #tpu.memory_space<vmem>>, vector<4x15xf32>,
    %c0_470 = arith.constant 0 : index
    %c0_471 = arith.constant 0 : index
    %c144_472 = arith.constant 144 : index
    %305 = vector.load %arg1[%c0_470, %c0_471, %c144_472] : memref<1x4x256xf32, #tpu.memory_space<vmem>>, vector<1x4x15xf32>
    %306 = vector.shape_cast %305 : vector<1x4x15xf32> to vector<4x15xf32>
    %c24_473 = arith.constant 24 : index
    %c129_474 = arith.constant 129 : index
    %307 = vector.load %arg6[%c24_473, %c129_474] : memref<36x256xf32, #tpu.memory_space<vmem>>, vector<4x15xf32>
    tpu.vector_store %arg6[%c24_473, %c129_474], %306 {strides = array<i32>} : memref<36x256xf32, #tpu.memory_space<vmem>>, vector<4x15xf32>,
    %c0_475 = arith.constant 0 : index
    %c0_476 = arith.constant 0 : index
    %c160_477 = arith.constant 160 : index
    %308 = vector.load %arg1[%c0_475, %c0_476, %c160_477] : memref<1x4x256xf32, #tpu.memory_space<vmem>>, vector<1x4x15xf32>
    %309 = vector.shape_cast %308 : vector<1x4x15xf32> to vector<4x15xf32>
    %c24_478 = arith.constant 24 : index
    %c145_479 = arith.constant 145 : index
    %310 = vector.load %arg6[%c24_478, %c145_479] : memref<36x256xf32, #tpu.memory_space<vmem>>, vector<4x15xf32>
    tpu.vector_store %arg6[%c24_478, %c145_479], %309 {strides = array<i32>} : memref<36x256xf32, #tpu.memory_space<vmem>>, vector<4x15xf32>,
    %c0_480 = arith.constant 0 : index
    %c0_481 = arith.constant 0 : index
    %c176_482 = arith.constant 176 : index
    %311 = vector.load %arg1[%c0_480, %c0_481, %c176_482] : memref<1x4x256xf32, #tpu.memory_space<vmem>>, vector<1x4x15xf32>
    %312 = vector.shape_cast %311 : vector<1x4x15xf32> to vector<4x15xf32>
    %c24_483 = arith.constant 24 : index
    %c161_484 = arith.constant 161 : index
    %313 = vector.load %arg6[%c24_483, %c161_484] : memref<36x256xf32, #tpu.memory_space<vmem>>, vector<4x15xf32>
    tpu.vector_store %arg6[%c24_483, %c161_484], %312 {strides = array<i32>} : memref<36x256xf32, #tpu.memory_space<vmem>>, vector<4x15xf32>,
    %c0_485 = arith.constant 0 : index
    %c0_486 = arith.constant 0 : index
    %c192_487 = arith.constant 192 : index
    %314 = vector.load %arg1[%c0_485, %c0_486, %c192_487] : memref<1x4x256xf32, #tpu.memory_space<vmem>>, vector<1x4x15xf32>
    %315 = vector.shape_cast %314 : vector<1x4x15xf32> to vector<4x15xf32>
    %c24_488 = arith.constant 24 : index
    %c177_489 = arith.constant 177 : index
    %316 = vector.load %arg6[%c24_488, %c177_489] : memref<36x256xf32, #tpu.memory_space<vmem>>, vector<4x15xf32>
    tpu.vector_store %arg6[%c24_488, %c177_489], %315 {strides = array<i32>} : memref<36x256xf32, #tpu.memory_space<vmem>>, vector<4x15xf32>,
    %c0_490 = arith.constant 0 : index
    %c0_491 = arith.constant 0 : index
    %c208_492 = arith.constant 208 : index
    %317 = vector.load %arg1[%c0_490, %c0_491, %c208_492] : memref<1x4x256xf32, #tpu.memory_space<vmem>>, vector<1x4x15xf32>
    %318 = vector.shape_cast %317 : vector<1x4x15xf32> to vector<4x15xf32>
    %c24_493 = arith.constant 24 : index
    %c193_494 = arith.constant 193 : index
    %319 = vector.load %arg6[%c24_493, %c193_494] : memref<36x256xf32, #tpu.memory_space<vmem>>, vector<4x15xf32>
    tpu.vector_store %arg6[%c24_493, %c193_494], %318 {strides = array<i32>} : memref<36x256xf32, #tpu.memory_space<vmem>>, vector<4x15xf32>,
    %c0_495 = arith.constant 0 : index
    %c0_496 = arith.constant 0 : index
    %c224_497 = arith.constant 224 : index
    %320 = vector.load %arg1[%c0_495, %c0_496, %c224_497] : memref<1x4x256xf32, #tpu.memory_space<vmem>>, vector<1x4x15xf32>
    %321 = vector.shape_cast %320 : vector<1x4x15xf32> to vector<4x15xf32>
    %c24_498 = arith.constant 24 : index
    %c209_499 = arith.constant 209 : index
    %322 = vector.load %arg6[%c24_498, %c209_499] : memref<36x256xf32, #tpu.memory_space<vmem>>, vector<4x15xf32>
    tpu.vector_store %arg6[%c24_498, %c209_499], %321 {strides = array<i32>} : memref<36x256xf32, #tpu.memory_space<vmem>>, vector<4x15xf32>,
    %c0_500 = arith.constant 0 : index
    %c0_501 = arith.constant 0 : index
    %c240_502 = arith.constant 240 : index
    %323 = vector.load %arg1[%c0_500, %c0_501, %c240_502] : memref<1x4x256xf32, #tpu.memory_space<vmem>>, vector<1x4x15xf32>
    %324 = vector.shape_cast %323 : vector<1x4x15xf32> to vector<4x15xf32>
    %c24_503 = arith.constant 24 : index
    %c225_504 = arith.constant 225 : index
    %325 = vector.load %arg6[%c24_503, %c225_504] : memref<36x256xf32, #tpu.memory_space<vmem>>, vector<4x15xf32>
    tpu.vector_store %arg6[%c24_503, %c225_504], %324 {strides = array<i32>} : memref<36x256xf32, #tpu.memory_space<vmem>>, vector<4x15xf32>,
    %c0_505 = arith.constant 0 : index
    %c0_506 = arith.constant 0 : index
    %c16_507 = arith.constant 16 : index
    %326 = vector.load %arg1[%c0_505, %c0_506, %c16_507] : memref<1x4x256xf32, #tpu.memory_space<vmem>>, vector<1x4x16xf32>
    %327 = vector.shape_cast %326 : vector<1x4x16xf32> to vector<4x16xf32>
    %c28 = arith.constant 28 : index
    %c0_508 = arith.constant 0 : index
    %328 = vector.load %arg6[%c28, %c0_508] : memref<36x256xf32, #tpu.memory_space<vmem>>, vector<4x16xf32>
    tpu.vector_store %arg6[%c28, %c0_508], %327 {strides = array<i32>} : memref<36x256xf32, #tpu.memory_space<vmem>>, vector<4x16xf32>,
    %c0_509 = arith.constant 0 : index
    %c0_510 = arith.constant 0 : index
    %c32_511 = arith.constant 32 : index
    %329 = vector.load %arg1[%c0_509, %c0_510, %c32_511] : memref<1x4x256xf32, #tpu.memory_space<vmem>>, vector<1x4x16xf32>
    %330 = vector.shape_cast %329 : vector<1x4x16xf32> to vector<4x16xf32>
    %c28_512 = arith.constant 28 : index
    %c16_513 = arith.constant 16 : index
    %331 = vector.load %arg6[%c28_512, %c16_513] : memref<36x256xf32, #tpu.memory_space<vmem>>, vector<4x16xf32>
    tpu.vector_store %arg6[%c28_512, %c16_513], %330 {strides = array<i32>} : memref<36x256xf32, #tpu.memory_space<vmem>>, vector<4x16xf32>,
    %c0_514 = arith.constant 0 : index
    %c0_515 = arith.constant 0 : index
    %c48_516 = arith.constant 48 : index
    %332 = vector.load %arg1[%c0_514, %c0_515, %c48_516] : memref<1x4x256xf32, #tpu.memory_space<vmem>>, vector<1x4x16xf32>
    %333 = vector.shape_cast %332 : vector<1x4x16xf32> to vector<4x16xf32>
    %c28_517 = arith.constant 28 : index
    %c32_518 = arith.constant 32 : index
    %334 = vector.load %arg6[%c28_517, %c32_518] : memref<36x256xf32, #tpu.memory_space<vmem>>, vector<4x16xf32>
    tpu.vector_store %arg6[%c28_517, %c32_518], %333 {strides = array<i32>} : memref<36x256xf32, #tpu.memory_space<vmem>>, vector<4x16xf32>,
    %c0_519 = arith.constant 0 : index
    %c0_520 = arith.constant 0 : index
    %c64_521 = arith.constant 64 : index
    %335 = vector.load %arg1[%c0_519, %c0_520, %c64_521] : memref<1x4x256xf32, #tpu.memory_space<vmem>>, vector<1x4x16xf32>
    %336 = vector.shape_cast %335 : vector<1x4x16xf32> to vector<4x16xf32>
    %c28_522 = arith.constant 28 : index
    %c48_523 = arith.constant 48 : index
    %337 = vector.load %arg6[%c28_522, %c48_523] : memref<36x256xf32, #tpu.memory_space<vmem>>, vector<4x16xf32>
    tpu.vector_store %arg6[%c28_522, %c48_523], %336 {strides = array<i32>} : memref<36x256xf32, #tpu.memory_space<vmem>>, vector<4x16xf32>,
    %c0_524 = arith.constant 0 : index
    %c0_525 = arith.constant 0 : index
    %c80_526 = arith.constant 80 : index
    %338 = vector.load %arg1[%c0_524, %c0_525, %c80_526] : memref<1x4x256xf32, #tpu.memory_space<vmem>>, vector<1x4x16xf32>
    %339 = vector.shape_cast %338 : vector<1x4x16xf32> to vector<4x16xf32>
    %c28_527 = arith.constant 28 : index
    %c64_528 = arith.constant 64 : index
    %340 = vector.load %arg6[%c28_527, %c64_528] : memref<36x256xf32, #tpu.memory_space<vmem>>, vector<4x16xf32>
    tpu.vector_store %arg6[%c28_527, %c64_528], %339 {strides = array<i32>} : memref<36x256xf32, #tpu.memory_space<vmem>>, vector<4x16xf32>,
    %c0_529 = arith.constant 0 : index
    %c0_530 = arith.constant 0 : index
    %c96_531 = arith.constant 96 : index
    %341 = vector.load %arg1[%c0_529, %c0_530, %c96_531] : memref<1x4x256xf32, #tpu.memory_space<vmem>>, vector<1x4x16xf32>
    %342 = vector.shape_cast %341 : vector<1x4x16xf32> to vector<4x16xf32>
    %c28_532 = arith.constant 28 : index
    %c80_533 = arith.constant 80 : index
    %343 = vector.load %arg6[%c28_532, %c80_533] : memref<36x256xf32, #tpu.memory_space<vmem>>, vector<4x16xf32>
    tpu.vector_store %arg6[%c28_532, %c80_533], %342 {strides = array<i32>} : memref<36x256xf32, #tpu.memory_space<vmem>>, vector<4x16xf32>,
    %c0_534 = arith.constant 0 : index
    %c0_535 = arith.constant 0 : index
    %c112_536 = arith.constant 112 : index
    %344 = vector.load %arg1[%c0_534, %c0_535, %c112_536] : memref<1x4x256xf32, #tpu.memory_space<vmem>>, vector<1x4x16xf32>
    %345 = vector.shape_cast %344 : vector<1x4x16xf32> to vector<4x16xf32>
    %c28_537 = arith.constant 28 : index
    %c96_538 = arith.constant 96 : index
    %346 = vector.load %arg6[%c28_537, %c96_538] : memref<36x256xf32, #tpu.memory_space<vmem>>, vector<4x16xf32>
    tpu.vector_store %arg6[%c28_537, %c96_538], %345 {strides = array<i32>} : memref<36x256xf32, #tpu.memory_space<vmem>>, vector<4x16xf32>,
    %c0_539 = arith.constant 0 : index
    %c0_540 = arith.constant 0 : index
    %c128_541 = arith.constant 128 : index
    %347 = vector.load %arg1[%c0_539, %c0_540, %c128_541] : memref<1x4x256xf32, #tpu.memory_space<vmem>>, vector<1x4x16xf32>
    %348 = vector.shape_cast %347 : vector<1x4x16xf32> to vector<4x16xf32>
    %c28_542 = arith.constant 28 : index
    %c112_543 = arith.constant 112 : index
    %349 = vector.load %arg6[%c28_542, %c112_543] : memref<36x256xf32, #tpu.memory_space<vmem>>, vector<4x16xf32>
    tpu.vector_store %arg6[%c28_542, %c112_543], %348 {strides = array<i32>} : memref<36x256xf32, #tpu.memory_space<vmem>>, vector<4x16xf32>,
    %c0_544 = arith.constant 0 : index
    %c0_545 = arith.constant 0 : index
    %c144_546 = arith.constant 144 : index
    %350 = vector.load %arg1[%c0_544, %c0_545, %c144_546] : memref<1x4x256xf32, #tpu.memory_space<vmem>>, vector<1x4x16xf32>
    %351 = vector.shape_cast %350 : vector<1x4x16xf32> to vector<4x16xf32>
    %c28_547 = arith.constant 28 : index
    %c128_548 = arith.constant 128 : index
    %352 = vector.load %arg6[%c28_547, %c128_548] : memref<36x256xf32, #tpu.memory_space<vmem>>, vector<4x16xf32>
    tpu.vector_store %arg6[%c28_547, %c128_548], %351 {strides = array<i32>} : memref<36x256xf32, #tpu.memory_space<vmem>>, vector<4x16xf32>,
    %c0_549 = arith.constant 0 : index
    %c0_550 = arith.constant 0 : index
    %c160_551 = arith.constant 160 : index
    %353 = vector.load %arg1[%c0_549, %c0_550, %c160_551] : memref<1x4x256xf32, #tpu.memory_space<vmem>>, vector<1x4x16xf32>
    %354 = vector.shape_cast %353 : vector<1x4x16xf32> to vector<4x16xf32>
    %c28_552 = arith.constant 28 : index
    %c144_553 = arith.constant 144 : index
    %355 = vector.load %arg6[%c28_552, %c144_553] : memref<36x256xf32, #tpu.memory_space<vmem>>, vector<4x16xf32>
    tpu.vector_store %arg6[%c28_552, %c144_553], %354 {strides = array<i32>} : memref<36x256xf32, #tpu.memory_space<vmem>>, vector<4x16xf32>,
    %c0_554 = arith.constant 0 : index
    %c0_555 = arith.constant 0 : index
    %c176_556 = arith.constant 176 : index
    %356 = vector.load %arg1[%c0_554, %c0_555, %c176_556] : memref<1x4x256xf32, #tpu.memory_space<vmem>>, vector<1x4x16xf32>
    %357 = vector.shape_cast %356 : vector<1x4x16xf32> to vector<4x16xf32>
    %c28_557 = arith.constant 28 : index
    %c160_558 = arith.constant 160 : index
    %358 = vector.load %arg6[%c28_557, %c160_558] : memref<36x256xf32, #tpu.memory_space<vmem>>, vector<4x16xf32>
    tpu.vector_store %arg6[%c28_557, %c160_558], %357 {strides = array<i32>} : memref<36x256xf32, #tpu.memory_space<vmem>>, vector<4x16xf32>,
    %c0_559 = arith.constant 0 : index
    %c0_560 = arith.constant 0 : index
    %c192_561 = arith.constant 192 : index
    %359 = vector.load %arg1[%c0_559, %c0_560, %c192_561] : memref<1x4x256xf32, #tpu.memory_space<vmem>>, vector<1x4x16xf32>
    %360 = vector.shape_cast %359 : vector<1x4x16xf32> to vector<4x16xf32>
    %c28_562 = arith.constant 28 : index
    %c176_563 = arith.constant 176 : index
    %361 = vector.load %arg6[%c28_562, %c176_563] : memref<36x256xf32, #tpu.memory_space<vmem>>, vector<4x16xf32>
    tpu.vector_store %arg6[%c28_562, %c176_563], %360 {strides = array<i32>} : memref<36x256xf32, #tpu.memory_space<vmem>>, vector<4x16xf32>,
    %c0_564 = arith.constant 0 : index
    %c0_565 = arith.constant 0 : index
    %c208_566 = arith.constant 208 : index
    %362 = vector.load %arg1[%c0_564, %c0_565, %c208_566] : memref<1x4x256xf32, #tpu.memory_space<vmem>>, vector<1x4x16xf32>
    %363 = vector.shape_cast %362 : vector<1x4x16xf32> to vector<4x16xf32>
    %c28_567 = arith.constant 28 : index
    %c192_568 = arith.constant 192 : index
    %364 = vector.load %arg6[%c28_567, %c192_568] : memref<36x256xf32, #tpu.memory_space<vmem>>, vector<4x16xf32>
    tpu.vector_store %arg6[%c28_567, %c192_568], %363 {strides = array<i32>} : memref<36x256xf32, #tpu.memory_space<vmem>>, vector<4x16xf32>,
    %c0_569 = arith.constant 0 : index
    %c0_570 = arith.constant 0 : index
    %c224_571 = arith.constant 224 : index
    %365 = vector.load %arg1[%c0_569, %c0_570, %c224_571] : memref<1x4x256xf32, #tpu.memory_space<vmem>>, vector<1x4x16xf32>
    %366 = vector.shape_cast %365 : vector<1x4x16xf32> to vector<4x16xf32>
    %c28_572 = arith.constant 28 : index
    %c208_573 = arith.constant 208 : index
    %367 = vector.load %arg6[%c28_572, %c208_573] : memref<36x256xf32, #tpu.memory_space<vmem>>, vector<4x16xf32>
    tpu.vector_store %arg6[%c28_572, %c208_573], %366 {strides = array<i32>} : memref<36x256xf32, #tpu.memory_space<vmem>>, vector<4x16xf32>,
    %c0_574 = arith.constant 0 : index
    %c0_575 = arith.constant 0 : index
    %c240_576 = arith.constant 240 : index
    %368 = vector.load %arg1[%c0_574, %c0_575, %c240_576] : memref<1x4x256xf32, #tpu.memory_space<vmem>>, vector<1x4x16xf32>
    %369 = vector.shape_cast %368 : vector<1x4x16xf32> to vector<4x16xf32>
    %c28_577 = arith.constant 28 : index
    %c224_578 = arith.constant 224 : index
    %370 = vector.load %arg6[%c28_577, %c224_578] : memref<36x256xf32, #tpu.memory_space<vmem>>, vector<4x16xf32>
    tpu.vector_store %arg6[%c28_577, %c224_578], %369 {strides = array<i32>} : memref<36x256xf32, #tpu.memory_space<vmem>>, vector<4x16xf32>,
    %c0_579 = arith.constant 0 : index
    %c0_580 = arith.constant 0 : index
    %c17_581 = arith.constant 17 : index
    %371 = vector.load %arg1[%c0_579, %c0_580, %c17_581] : memref<1x4x256xf32, #tpu.memory_space<vmem>>, vector<1x4x15xf32>
    %372 = vector.shape_cast %371 : vector<1x4x15xf32> to vector<4x15xf32>
    %c32_582 = arith.constant 32 : index
    %c0_583 = arith.constant 0 : index
    %373 = vector.load %arg6[%c32_582, %c0_583] : memref<36x256xf32, #tpu.memory_space<vmem>>, vector<4x15xf32>
    tpu.vector_store %arg6[%c32_582, %c0_583], %372 {strides = array<i32>} : memref<36x256xf32, #tpu.memory_space<vmem>>, vector<4x15xf32>,
    %c0_584 = arith.constant 0 : index
    %c0_585 = arith.constant 0 : index
    %c33_586 = arith.constant 33 : index
    %374 = vector.load %arg1[%c0_584, %c0_585, %c33_586] : memref<1x4x256xf32, #tpu.memory_space<vmem>>, vector<1x4x15xf32>
    %375 = vector.shape_cast %374 : vector<1x4x15xf32> to vector<4x15xf32>
    %c32_587 = arith.constant 32 : index
    %c16_588 = arith.constant 16 : index
    %376 = vector.load %arg6[%c32_587, %c16_588] : memref<36x256xf32, #tpu.memory_space<vmem>>, vector<4x15xf32>
    tpu.vector_store %arg6[%c32_587, %c16_588], %375 {strides = array<i32>} : memref<36x256xf32, #tpu.memory_space<vmem>>, vector<4x15xf32>,
    %c0_589 = arith.constant 0 : index
    %c0_590 = arith.constant 0 : index
    %c49_591 = arith.constant 49 : index
    %377 = vector.load %arg1[%c0_589, %c0_590, %c49_591] : memref<1x4x256xf32, #tpu.memory_space<vmem>>, vector<1x4x15xf32>
    %378 = vector.shape_cast %377 : vector<1x4x15xf32> to vector<4x15xf32>
    %c32_592 = arith.constant 32 : index
    %c32_593 = arith.constant 32 : index
    %379 = vector.load %arg6[%c32_592, %c32_593] : memref<36x256xf32, #tpu.memory_space<vmem>>, vector<4x15xf32>
    tpu.vector_store %arg6[%c32_592, %c32_593], %378 {strides = array<i32>} : memref<36x256xf32, #tpu.memory_space<vmem>>, vector<4x15xf32>,
    %c0_594 = arith.constant 0 : index
    %c0_595 = arith.constant 0 : index
    %c65_596 = arith.constant 65 : index
    %380 = vector.load %arg1[%c0_594, %c0_595, %c65_596] : memref<1x4x256xf32, #tpu.memory_space<vmem>>, vector<1x4x15xf32>
    %381 = vector.shape_cast %380 : vector<1x4x15xf32> to vector<4x15xf32>
    %c32_597 = arith.constant 32 : index
    %c48_598 = arith.constant 48 : index
    %382 = vector.load %arg6[%c32_597, %c48_598] : memref<36x256xf32, #tpu.memory_space<vmem>>, vector<4x15xf32>
    tpu.vector_store %arg6[%c32_597, %c48_598], %381 {strides = array<i32>} : memref<36x256xf32, #tpu.memory_space<vmem>>, vector<4x15xf32>,
    %c0_599 = arith.constant 0 : index
    %c0_600 = arith.constant 0 : index
    %c81_601 = arith.constant 81 : index
    %383 = vector.load %arg1[%c0_599, %c0_600, %c81_601] : memref<1x4x256xf32, #tpu.memory_space<vmem>>, vector<1x4x15xf32>
    %384 = vector.shape_cast %383 : vector<1x4x15xf32> to vector<4x15xf32>
    %c32_602 = arith.constant 32 : index
    %c64_603 = arith.constant 64 : index
    %385 = vector.load %arg6[%c32_602, %c64_603] : memref<36x256xf32, #tpu.memory_space<vmem>>, vector<4x15xf32>
    tpu.vector_store %arg6[%c32_602, %c64_603], %384 {strides = array<i32>} : memref<36x256xf32, #tpu.memory_space<vmem>>, vector<4x15xf32>,
    %c0_604 = arith.constant 0 : index
    %c0_605 = arith.constant 0 : index
    %c97_606 = arith.constant 97 : index
    %386 = vector.load %arg1[%c0_604, %c0_605, %c97_606] : memref<1x4x256xf32, #tpu.memory_space<vmem>>, vector<1x4x15xf32>
    %387 = vector.shape_cast %386 : vector<1x4x15xf32> to vector<4x15xf32>
    %c32_607 = arith.constant 32 : index
    %c80_608 = arith.constant 80 : index
    %388 = vector.load %arg6[%c32_607, %c80_608] : memref<36x256xf32, #tpu.memory_space<vmem>>, vector<4x15xf32>
    tpu.vector_store %arg6[%c32_607, %c80_608], %387 {strides = array<i32>} : memref<36x256xf32, #tpu.memory_space<vmem>>, vector<4x15xf32>,
    %c0_609 = arith.constant 0 : index
    %c0_610 = arith.constant 0 : index
    %c113_611 = arith.constant 113 : index
    %389 = vector.load %arg1[%c0_609, %c0_610, %c113_611] : memref<1x4x256xf32, #tpu.memory_space<vmem>>, vector<1x4x15xf32>
    %390 = vector.shape_cast %389 : vector<1x4x15xf32> to vector<4x15xf32>
    %c32_612 = arith.constant 32 : index
    %c96_613 = arith.constant 96 : index
    %391 = vector.load %arg6[%c32_612, %c96_613] : memref<36x256xf32, #tpu.memory_space<vmem>>, vector<4x15xf32>
    tpu.vector_store %arg6[%c32_612, %c96_613], %390 {strides = array<i32>} : memref<36x256xf32, #tpu.memory_space<vmem>>, vector<4x15xf32>,
    %c0_614 = arith.constant 0 : index
    %c0_615 = arith.constant 0 : index
    %c129_616 = arith.constant 129 : index
    %392 = vector.load %arg1[%c0_614, %c0_615, %c129_616] : memref<1x4x256xf32, #tpu.memory_space<vmem>>, vector<1x4x15xf32>
    %393 = vector.shape_cast %392 : vector<1x4x15xf32> to vector<4x15xf32>
    %c32_617 = arith.constant 32 : index
    %c112_618 = arith.constant 112 : index
    %394 = vector.load %arg6[%c32_617, %c112_618] : memref<36x256xf32, #tpu.memory_space<vmem>>, vector<4x15xf32>
    tpu.vector_store %arg6[%c32_617, %c112_618], %393 {strides = array<i32>} : memref<36x256xf32, #tpu.memory_space<vmem>>, vector<4x15xf32>,
    %c0_619 = arith.constant 0 : index
    %c0_620 = arith.constant 0 : index
    %c145_621 = arith.constant 145 : index
    %395 = vector.load %arg1[%c0_619, %c0_620, %c145_621] : memref<1x4x256xf32, #tpu.memory_space<vmem>>, vector<1x4x15xf32>
    %396 = vector.shape_cast %395 : vector<1x4x15xf32> to vector<4x15xf32>
    %c32_622 = arith.constant 32 : index
    %c128_623 = arith.constant 128 : index
    %397 = vector.load %arg6[%c32_622, %c128_623] : memref<36x256xf32, #tpu.memory_space<vmem>>, vector<4x15xf32>
    tpu.vector_store %arg6[%c32_622, %c128_623], %396 {strides = array<i32>} : memref<36x256xf32, #tpu.memory_space<vmem>>, vector<4x15xf32>,
    %c0_624 = arith.constant 0 : index
    %c0_625 = arith.constant 0 : index
    %c161_626 = arith.constant 161 : index
    %398 = vector.load %arg1[%c0_624, %c0_625, %c161_626] : memref<1x4x256xf32, #tpu.memory_space<vmem>>, vector<1x4x15xf32>
    %399 = vector.shape_cast %398 : vector<1x4x15xf32> to vector<4x15xf32>
    %c32_627 = arith.constant 32 : index
    %c144_628 = arith.constant 144 : index
    %400 = vector.load %arg6[%c32_627, %c144_628] : memref<36x256xf32, #tpu.memory_space<vmem>>, vector<4x15xf32>
    tpu.vector_store %arg6[%c32_627, %c144_628], %399 {strides = array<i32>} : memref<36x256xf32, #tpu.memory_space<vmem>>, vector<4x15xf32>,
    %c0_629 = arith.constant 0 : index
    %c0_630 = arith.constant 0 : index
    %c177_631 = arith.constant 177 : index
    %401 = vector.load %arg1[%c0_629, %c0_630, %c177_631] : memref<1x4x256xf32, #tpu.memory_space<vmem>>, vector<1x4x15xf32>
    %402 = vector.shape_cast %401 : vector<1x4x15xf32> to vector<4x15xf32>
    %c32_632 = arith.constant 32 : index
    %c160_633 = arith.constant 160 : index
    %403 = vector.load %arg6[%c32_632, %c160_633] : memref<36x256xf32, #tpu.memory_space<vmem>>, vector<4x15xf32>
    tpu.vector_store %arg6[%c32_632, %c160_633], %402 {strides = array<i32>} : memref<36x256xf32, #tpu.memory_space<vmem>>, vector<4x15xf32>,
    %c0_634 = arith.constant 0 : index
    %c0_635 = arith.constant 0 : index
    %c193_636 = arith.constant 193 : index
    %404 = vector.load %arg1[%c0_634, %c0_635, %c193_636] : memref<1x4x256xf32, #tpu.memory_space<vmem>>, vector<1x4x15xf32>
    %405 = vector.shape_cast %404 : vector<1x4x15xf32> to vector<4x15xf32>
    %c32_637 = arith.constant 32 : index
    %c176_638 = arith.constant 176 : index
    %406 = vector.load %arg6[%c32_637, %c176_638] : memref<36x256xf32, #tpu.memory_space<vmem>>, vector<4x15xf32>
    tpu.vector_store %arg6[%c32_637, %c176_638], %405 {strides = array<i32>} : memref<36x256xf32, #tpu.memory_space<vmem>>, vector<4x15xf32>,
    %c0_639 = arith.constant 0 : index
    %c0_640 = arith.constant 0 : index
    %c209_641 = arith.constant 209 : index
    %407 = vector.load %arg1[%c0_639, %c0_640, %c209_641] : memref<1x4x256xf32, #tpu.memory_space<vmem>>, vector<1x4x15xf32>
    %408 = vector.shape_cast %407 : vector<1x4x15xf32> to vector<4x15xf32>
    %c32_642 = arith.constant 32 : index
    %c192_643 = arith.constant 192 : index
    %409 = vector.load %arg6[%c32_642, %c192_643] : memref<36x256xf32, #tpu.memory_space<vmem>>, vector<4x15xf32>
    tpu.vector_store %arg6[%c32_642, %c192_643], %408 {strides = array<i32>} : memref<36x256xf32, #tpu.memory_space<vmem>>, vector<4x15xf32>,
    %c0_644 = arith.constant 0 : index
    %c0_645 = arith.constant 0 : index
    %c225_646 = arith.constant 225 : index
    %410 = vector.load %arg1[%c0_644, %c0_645, %c225_646] : memref<1x4x256xf32, #tpu.memory_space<vmem>>, vector<1x4x15xf32>
    %411 = vector.shape_cast %410 : vector<1x4x15xf32> to vector<4x15xf32>
    %c32_647 = arith.constant 32 : index
    %c208_648 = arith.constant 208 : index
    %412 = vector.load %arg6[%c32_647, %c208_648] : memref<36x256xf32, #tpu.memory_space<vmem>>, vector<4x15xf32>
    tpu.vector_store %arg6[%c32_647, %c208_648], %411 {strides = array<i32>} : memref<36x256xf32, #tpu.memory_space<vmem>>, vector<4x15xf32>,
    %c0_649 = arith.constant 0 : index
    %c0_650 = arith.constant 0 : index
    %c241_651 = arith.constant 241 : index
    %413 = vector.load %arg1[%c0_649, %c0_650, %c241_651] : memref<1x4x256xf32, #tpu.memory_space<vmem>>, vector<1x4x15xf32>
    %414 = vector.shape_cast %413 : vector<1x4x15xf32> to vector<4x15xf32>
    %c32_652 = arith.constant 32 : index
    %c224_653 = arith.constant 224 : index
    %415 = vector.load %arg6[%c32_652, %c224_653] : memref<36x256xf32, #tpu.memory_space<vmem>>, vector<4x15xf32>
    tpu.vector_store %arg6[%c32_652, %c224_653], %414 {strides = array<i32>} : memref<36x256xf32, #tpu.memory_space<vmem>>, vector<4x15xf32>,
    %c0_654 = arith.constant 0 : index
    %c0_655 = arith.constant 0 : index
    %416 = vector.load %arg2[%c0_654, %c0_655] : memref<8x36xf32, #tpu.memory_space<vmem>>, vector<8x36xf32>
    %c0_656 = arith.constant 0 : index
    %c0_657 = arith.constant 0 : index
    %417 = vector.load %arg6[%c0_656, %c0_657] : memref<36x256xf32, #tpu.memory_space<vmem>>, vector<36x256xf32>
    %cst_658 = arith.constant dense<0.000000e+00> : vector<8x256xf32>
    %418 = tpu.matmul %416, %417, %cst_658 {dimension_numbers = #tpu.dot_dimension_numbers<[1], [0], [0], [1], [0, 0, 1, 1], [], []>} : vector<8x36xf32>, vector<36x256xf32>, vector<8x256xf32> -> vector<8x256xf32>
    %c0_659 = arith.constant 0 : index
    %c0_660 = arith.constant 0 : index
    %419 = vector.load %arg3[%c0_659, %c0_660] : memref<8x1xf32, #tpu.memory_space<vmem>>, vector<8x1xf32>
    %420 = vector.broadcast %419 : vector<8x1xf32> to vector<8x256xf32>
    %421 = arith.mulf %418, %420 : vector<8x256xf32>
    %c0_661 = arith.constant 0 : index
    %c0_662 = arith.constant 0 : index
    %422 = vector.load %arg4[%c0_661, %c0_662] : memref<8x1xf32, #tpu.memory_space<vmem>>, vector<8x1xf32>
    %423 = vector.broadcast %422 : vector<8x1xf32> to vector<8x256xf32>
    %424 = arith.addf %421, %423 : vector<8x256xf32>
    %cst_663 = arith.constant 0.000000e+00 : f32
    %425 = vector.broadcast %cst_663 : f32 to vector<8x256xf32>
    %426 = arith.maximumf %424, %425 : vector<8x256xf32>
    %c0_664 = arith.constant 0 : index
    %c0_665 = arith.constant 0 : index
    %c0_666 = arith.constant 0 : index
    %427 = vector.load %arg5[%c0_664, %c0_665, %c0_666] : memref<1x8x256xf32, #tpu.memory_space<vmem>>, vector<1x8x256xf32>
    %428 = vector.shape_cast %427 : vector<1x8x256xf32> to vector<8x256xf32>
    %429 = vector.shape_cast %426 : vector<8x256xf32> to vector<1x8x256xf32>
    tpu.vector_store %arg5[%c0_664, %c0_665, %c0_666], %429 {strides = array<i32>} : memref<1x8x256xf32, #tpu.memory_space<vmem>>, vector<1x8x256xf32>,
    return
  }
  func.func @transform_0(%arg0: i32) -> (i32, i32, i32) {
    %c0_i32 = arith.constant 0 : i32
    %c0_i32_0 = arith.constant 0 : i32
    %c0_i32_1 = arith.constant 0 : i32
    return %arg0, %c0_i32, %c0_i32_0 : i32, i32, i32
  }
  func.func @transform_1(%arg0: i32) -> (i32, i32) {
    %c0_i32 = arith.constant 0 : i32
    %c0_i32_0 = arith.constant 0 : i32
    %c0_i32_1 = arith.constant 0 : i32
    return %c0_i32, %c0_i32_0 : i32, i32
  }
  func.func @transform_2(%arg0: i32) -> (i32, i32) {
    %c0_i32 = arith.constant 0 : i32
    %c0_i32_0 = arith.constant 0 : i32
    %c0_i32_1 = arith.constant 0 : i32
    return %c0_i32, %c0_i32_0 : i32, i32
  }
  func.func @transform_3(%arg0: i32) -> (i32, i32) {
    %c0_i32 = arith.constant 0 : i32
    %c0_i32_0 = arith.constant 0 : i32
    %c0_i32_1 = arith.constant 0 : i32
    return %c0_i32, %c0_i32_0 : i32, i32
  }
  func.func @transform_4(%arg0: i32) -> (i32, i32, i32) {
    %c0_i32 = arith.constant 0 : i32
    %c0_i32_0 = arith.constant 0 : i32
    %c0_i32_1 = arith.constant 0 : i32
    return %arg0, %c0_i32, %c0_i32_0 : i32, i32, i32
  }
}

</mosaic_0001>

<llo_original>
// kernel: basic_conv2d_forward.1
$region0: #{basic_conv2d_forward.1}
  #allocation0 [shape = 'u32[]', space=smem, size = 0x4, offset = 0x4, fixed_abs, tag = 'smem constant byte address 0x4 - core index']
  #allocation1 [shape = 'u32[144,128]{1,0:T(1,128)}', space=vmem, size = 0x12000, scoped, tag = 'internal scratch']
  #allocation2 [shape = 'f32[36,256]{1,0:T(8,128)}', space=vmem, size = 0xa000, scoped, tag = 'scratch operand']
  %s0 = inlined_call_operand.vmem [shape: f32[2,4,256], index: 0, kind: input, shape index: {}]
  %s1 = inlined_call_operand.vmem [shape: f32[8,36], index: 1, kind: input, shape index: {}]
  %s2 = inlined_call_operand.vmem [shape: f32[8,1], index: 2, kind: input, shape index: {}]
  %s3 = inlined_call_operand.vmem [shape: f32[8,1], index: 3, kind: input, shape index: {}]
  %s4 = inlined_call_operand.vmem [shape: f32[2,8,256], index: 4, kind: output, shape index: {}]
  %s5 = sld [smem:[#allocation0]]
  $region49: #{basic_conv2d_forward.1} parent=0
    _
  %s7 = ssub.s32 1, %s5
  %s8 = scalar_select 0, %s7, %s5
  loop: start=0, step=1, limit=4
  $region2: #{basic_conv2d_forward.1} parent=0 // loop_pre_header
    _
  $region3: #{basic_conv2d_forward.1} parent=0 // loop_header
    %s10 = sphi 0, %s14
    %p11 = scmp.ge.s32.totalorder %s10, 4
    %s20 = sphi 0, %s22
    %s23 = sphi 0, %s20
    %s24 = sphi 0, %s23
    %s40 = sphi 0, %s24
    %s44 = sphi 0, %s44
    %s46 = sphi 0, %s44
    %s47 = sphi 0, %s46
    %s61 = sphi 0, %s47
    %s65 = sphi 0, %s65
    %s67 = sphi 0, %s65
    %s68 = sphi 0, %s67
    %s82 = sphi 0, %s68
    %s86 = sphi 0, %s86
    %s88 = sphi 0, %s86
    %s89 = sphi 0, %s88
    %s103 = sphi 0, %s89
    %s109 = sphi 0, %s111
    %s112 = sphi 0, %s109
    %s113 = sphi 0, %s112
    %s129 = sphi 0, %s113
  $region4: #{basic_conv2d_forward.1} parent=0 // loop_header_branch
    %13 = sbr.rel (%p11) target = $region8
  $region5: #{basic_conv2d_forward.1} parent=0 // loop_body
    %s15 = ssub.s32 %s10, 1
    %s16 = ssub.s32 %s10, 2
    %s17 = sadd.s32 %s10, 1
    %s18 = ssub.s32 %s10, %s17
    %p19 = scmp.eq.s32.totalorder %s18, 0
    %s21 = sadd.s32 %s20, 1
    %s22 = scalar_select %p19, %s20, %s21
    %p25 = pneg %p19
    %p26 = scmp.eq.s32.totalorder %s10, 1
    %p27 = por %p25, %p26
    %p28 = scmp.ne.s32.totalorder %s20, %s23
    %p29 = scmp.eq.s32.totalorder %s10, 0
    %p30 = por %p28, %p29
    %p31 = scmp.ne.s32.totalorder %s20, %s23
    %p32 = scmp.eq.s32.totalorder %s15, 1
    %p33 = por %p31, %p32
    %p34 = scmp.ne.s32.totalorder %s23, %s24
    %p35 = scmp.eq.s32.totalorder %s15, 0
    %p36 = por %p34, %p35
    %p37 = scmp.ne.s32.totalorder %s23, %s24
    %p38 = scmp.eq.s32.totalorder %s16, 1
    %p39 = por %p37, %p38
    %p41 = scmp.ne.s32.totalorder %s24, %s40
    %p42 = scmp.eq.s32.totalorder %s16, 0
    %p43 = por %p41, %p42
    %s45 = sadd.s32 %s44, 1
    %p48 = scmp.eq.s32.totalorder %s10, 1
    %p49 = scmp.ne.s32.totalorder %s44, %s46
    %p50 = scmp.eq.s32.totalorder %s10, 0
    %p51 = por %p49, %p50
    %p52 = scmp.ne.s32.totalorder %s44, %s46
    %p53 = scmp.eq.s32.totalorder %s15, 1
    %p54 = por %p52, %p53
    %p55 = scmp.ne.s32.totalorder %s46, %s47
    %p56 = scmp.eq.s32.totalorder %s15, 0
    %p57 = por %p55, %p56
    %p58 = scmp.ne.s32.totalorder %s46, %s47
    %p59 = scmp.eq.s32.totalorder %s16, 1
    %p60 = por %p58, %p59
    %p62 = scmp.ne.s32.totalorder %s47, %s61
    %p63 = scmp.eq.s32.totalorder %s16, 0
    %p64 = por %p62, %p63
    %s66 = sadd.s32 %s65, 1
    %p69 = scmp.eq.s32.totalorder %s10, 1
    %p70 = scmp.ne.s32.totalorder %s65, %s67
    %p71 = scmp.eq.s32.totalorder %s10, 0
    %p72 = por %p70, %p71
    %p73 = scmp.ne.s32.totalorder %s65, %s67
    %p74 = scmp.eq.s32.totalorder %s15, 1
    %p75 = por %p73, %p74
    %p76 = scmp.ne.s32.totalorder %s67, %s68
    %p77 = scmp.eq.s32.totalorder %s15, 0
    %p78 = por %p76, %p77
    %p79 = scmp.ne.s32.totalorder %s67, %s68
    %p80 = scmp.eq.s32.totalorder %s16, 1
    %p81 = por %p79, %p80
    %p83 = scmp.ne.s32.totalorder %s68, %s82
    %p84 = scmp.eq.s32.totalorder %s16, 0
    %p85 = por %p83, %p84
    %s87 = sadd.s32 %s86, 1
    %p90 = scmp.eq.s32.totalorder %s10, 1
    %p91 = scmp.ne.s32.totalorder %s86, %s88
    %p92 = scmp.eq.s32.totalorder %s10, 0
    %p93 = por %p91, %p92
    %p94 = scmp.ne.s32.totalorder %s86, %s88
    %p95 = scmp.eq.s32.totalorder %s15, 1
    %p96 = por %p94, %p95
    %p97 = scmp.ne.s32.totalorder %s88, %s89
    %p98 = scmp.eq.s32.totalorder %s15, 0
    %p99 = por %p97, %p98
    %p100 = scmp.ne.s32.totalorder %s88, %s89
    %p101 = scmp.eq.s32.totalorder %s16, 1
    %p102 = por %p100, %p101
    %p104 = scmp.ne.s32.totalorder %s89, %s103
    %p105 = scmp.eq.s32.totalorder %s16, 0
    %p106 = por %p104, %p105
    %s107 = ssub.s32 %s10, %s17
    %p108 = scmp.eq.s32.totalorder %s107, 0
    %s110 = sadd.s32 %s109, 1
    %s111 = scalar_select %p108, %s109, %s110
    %p114 = pneg %p108
    %p115 = scmp.eq.s32.totalorder %s10, 1
    %p116 = por %p114, %p115
    %p117 = scmp.ne.s32.totalorder %s109, %s112
    %p118 = scmp.eq.s32.totalorder %s10, 0
    %p119 = por %p117, %p118
    %p120 = scmp.ne.s32.totalorder %s109, %s112
    %p121 = scmp.eq.s32.totalorder %s15, 1
    %p122 = por %p120, %p121
    %p123 = scmp.ne.s32.totalorder %s112, %s113
    %p124 = scmp.eq.s32.totalorder %s15, 0
    %p125 = por %p123, %p124
    %p126 = scmp.ne.s32.totalorder %s112, %s113
    %p127 = scmp.eq.s32.totalorder %s16, 1
    %p128 = por %p126, %p127
    %p130 = scmp.ne.s32.totalorder %s113, %s129
    %p131 = scmp.eq.s32.totalorder %s16, 0
    %p132 = por %p130, %p131
    %p133 = scmp.le.s32.totalorder 1, %s10
    %p134 = scmp.lt.s32.totalorder %s10, 3
    %p135 = pnand %p133, %p134
    %p136 = pneg %p135
    // Predicated region
    $region9: #{basic_conv2d_forward.1} parent=5 // pred_check
      _
    $region10: #{basic_conv2d_forward.1} parent=5 // pred_check_branch
      %138 = sbr.rel (%p135) target = $region12
    $region11: #{basic_conv2d_forward.1} parent=5 // pred_region
      %s139 = ssub.s32 %s10, 1
      // Predicated region
      $region13: #{basic_conv2d_forward.1} parent=11 // pred_check
        %p140 = pneg %p57
      $region14: #{basic_conv2d_forward.1} parent=11 // pred_check_branch
        %142 = sbr.rel (%p140) target = $region16
      $region15: #{basic_conv2d_forward.1} parent=11 // pred_region
        _
      $region16: #{basic_conv2d_forward.1} parent=11 // pred_fallthru
        _
      // Predicated region
      $region17: #{basic_conv2d_forward.1} parent=11 // pred_check
        %p143 = pneg %p78
      $region18: #{basic_conv2d_forward.1} parent=11 // pred_check_branch
        %145 = sbr.rel (%p143) target = $region20
      $region19: #{basic_conv2d_forward.1} parent=11 // pred_region
        _
      $region20: #{basic_conv2d_forward.1} parent=11 // pred_fallthru
        _
      // Predicated region
      $region21: #{basic_conv2d_forward.1} parent=11 // pred_check
        %p146 = pneg %p99
      $region22: #{basic_conv2d_forward.1} parent=11 // pred_check_branch
        %148 = sbr.rel (%p146) target = $region24
      $region23: #{basic_conv2d_forward.1} parent=11 // pred_region
        _
      $region24: #{basic_conv2d_forward.1} parent=11 // pred_fallthru
        _
    $region12: #{basic_conv2d_forward.1} parent=5 // pred_fallthru
      _
    %p149 = scmp.lt.s32.totalorder %s10, 2
    // Predicated region
    $region25: #{basic_conv2d_forward.1} parent=5 // pred_check
      %p150 = pneg %p149
    $region26: #{basic_conv2d_forward.1} parent=5 // pred_check_branch
      %152 = sbr.rel (%p150) target = $region28
    $region27: #{basic_conv2d_forward.1} parent=5 // pred_region
      // Predicated region
      $region29: #{basic_conv2d_forward.1} parent=27 // pred_check
        %p153 = pneg %p30
      $region30: #{basic_conv2d_forward.1} parent=27 // pred_check_branch
        %155 = sbr.rel (%p153) target = $region32
      $region31: #{basic_conv2d_forward.1} parent=27 // pred_region
        %p156 = scmp.lt.s32.totalorder %s10, 1
        %s157 = scalar_select %p156, %s10, 1
        %s158 = smul.addr %s157, 2
        %s159 = smul.addr %s158, 4
        %s160 = scalar_lea.vmem %s0, %s159
      $region32: #{basic_conv2d_forward.1} parent=27 // pred_fallthru
        _
    $region28: #{basic_conv2d_forward.1} parent=5 // pred_fallthru
      _
    %p161 = scmp.le.s32.totalorder 1, %s10
    %p162 = scmp.lt.s32.totalorder %s10, 3
    %p163 = pnand %p161, %p162
    %p164 = pneg %p163
    // Predicated region
    $region33: #{basic_conv2d_forward.1} parent=5 // pred_check
      _
    $region34: #{basic_conv2d_forward.1} parent=5 // pred_check_branch
      %166 = sbr.rel (%p163) target = $region36
    $region35: #{basic_conv2d_forward.1} parent=5 // pred_region
      %s167 = ssub.s32 %s10, 1
      %p168 = scmp.lt.s32.totalorder %s15, 1
      %s169 = scalar_select %p168, %s15, 1
      %s170 = smul.addr %s169, 2
      %s171 = smul.addr %s170, 4
      %s172 = scalar_lea.vmem %s0, %s171
      %p173 = pneg %p36
      %p174 = pneg %p33
      %p175 = pneg %p57
      %p176 = pneg %p54
      %p177 = pneg %p78
      %p178 = pneg %p75
      %p179 = pneg %p99
      %p180 = pneg %p96
      %p181 = pneg %p125
      %p182 = pneg %p122
      %p183 = scmp.lt.s32.totalorder %s15, 1
      %s184 = scalar_select %p183, %s15, 1
      %s185 = smul.addr %s184, 2
      %s186 = smul.addr %s185, 8
      %s187 = scalar_lea.vmem %s4, %s186
      %p188 = scmp.lt.s32.totalorder %s15, 1
      %s189 = scalar_select %p188, %s15, 1
      %s190 = smul.addr %s189, 2
      %s191 = smul.addr %s190, 4
      %s192 = scalar_lea.vmem %s0, %s191
      %p193 = scmp.lt.s32.totalorder %s15, 1
      %s194 = scalar_select %p193, %s15, 1
      %s195 = smul.addr %s194, 2
      %s196 = smul.addr %s195, 8
      %s197 = scalar_lea.vmem %s4, %s196
      %198 = vst [vmem:[#allocation2] sm:$0xff] 0.0
      %199 = vst [vmem:[#allocation2 + $0x8] sm:$0xff] 0.0
      %200 = vst [vmem:[#allocation2 + $0x10] sm:$0xff] 0.0
      %201 = vst [vmem:[#allocation2 + $0x18] sm:$0xff] 0.0
      %202 = vst [vmem:[#allocation2 + $0x20] sm:$0xff] 0.0
      %203 = vst [vmem:[#allocation2 + $0x28] sm:$0xff] 0.0
      %204 = vst [vmem:[#allocation2 + $0x30] sm:$0xff] 0.0
      %205 = vst [vmem:[#allocation2 + $0x38] sm:$0xff] 0.0
      %206 = vst [vmem:[#allocation2 + $0x40] sm:$0xf] 0.0
      %207 = vst [vmem:[#allocation2 + $0x48] sm:$0xf] 0.0
      %v208 = vld [vmem:[%s192] sm:$0xf]
      %210 = vrot.lane.b32.xlu0 %v208, 17
      %v211 = vpop.permute.xlu0 %210
      %vm213 = vcmask 257160
      %214 = vst.msk [vmem:[#allocation2] sm:$0xf] %vm213, %v211
      %v215 = vld [vmem:[%s192] sm:$0xf]
      %217 = vrot.lane.b32.xlu0 %v215, 17
      %v218 = vpop.permute.xlu0 %217
      %vm220 = vcmask 388360
      %221 = vst.msk [vmem:[#allocation2] sm:$0xf] %vm220, %v218
      %v222 = vld [vmem:[%s192] sm:$0xf]
      %224 = vrot.lane.b32.xlu0 %v222, 17
      %v225 = vpop.permute.xlu0 %224
      %vm227 = vcmask 519560
      %228 = vst.msk [vmem:[#allocation2] sm:$0xf] %vm227, %v225
      %v229 = vld [vmem:[%s192] sm:$0xf]
      %231 = vrot.lane.b32.xlu0 %v229, 17
      %v232 = vpop.permute.xlu0 %231
      %vm234 = vcmask 650760
      %235 = vst.msk [vmem:[#allocation2] sm:$0xf] %vm234, %v232
      %v236 = vld [vmem:[%s192] sm:$0xf]
      %238 = vrot.lane.b32.xlu0 %v236, 17
      %v239 = vpop.permute.xlu0 %238
      %vm241 = vcmask 781960
      %242 = vst.msk [vmem:[#allocation2] sm:$0xf] %vm241, %v239
      %v243 = vld [vmem:[%s192] sm:$0xf]
      %245 = vrot.lane.b32.xlu0 %v243, 17
      %v246 = vpop.permute.xlu0 %245
      %vm248 = vcmask 913160
      %249 = vst.msk [vmem:[#allocation2] sm:$0xf] %vm248, %v246
      %v250 = vld [vmem:[%s192] sm:$0xf]
      %252 = vrot.lane.b32.xlu0 %v250, 17
      %v253 = vpop.permute.xlu0 %252
      %vm255 = vcmask 1044360
      %256 = vst.msk [vmem:[#allocation2] sm:$0xf] %vm255, %v253
      %v257 = vld [vmem:[%s192] sm:$0xf]
      %259 = vrot.lane.b32.xlu0 %v257, 17
      %v260 = vpop.permute.xlu0 %259
      %vm262 = vcmask 125960
      %263 = vst.msk [vmem:[#allocation2 + $0x8] sm:$0xf] %vm262, %v260
      %v264 = vld [vmem:[%s192 + $0x4] sm:$0xf]
      %266 = vrot.lane.b32.xlu0 %v264, 17
      %v267 = vpop.permute.xlu0 %266
      %269 = vst.msk [vmem:[#allocation2 + $0x8] sm:$0xf] %vm213, %v267
      %v270 = vld [vmem:[%s192 + $0x4] sm:$0xf]
      %272 = vrot.lane.b32.xlu0 %v270, 17
      %v273 = vpop.permute.xlu0 %272
      %275 = vst.msk [vmem:[#allocation2 + $0x8] sm:$0xf] %vm220, %v273
      %v276 = vld [vmem:[%s192 + $0x4] sm:$0xf]
      %278 = vrot.lane.b32.xlu0 %v276, 17
      %v279 = vpop.permute.xlu0 %278
      %281 = vst.msk [vmem:[#allocation2 + $0x8] sm:$0xf] %vm227, %v279
      %v282 = vld [vmem:[%s192 + $0x4] sm:$0xf]
      %284 = vrot.lane.b32.xlu0 %v282, 17
      %v285 = vpop.permute.xlu0 %284
      %287 = vst.msk [vmem:[#allocation2 + $0x8] sm:$0xf] %vm234, %v285
      %v288 = vld [vmem:[%s192 + $0x4] sm:$0xf]
      %290 = vrot.lane.b32.xlu0 %v288, 17
      %v291 = vpop.permute.xlu0 %290
      %293 = vst.msk [vmem:[#allocation2 + $0x8] sm:$0xf] %vm241, %v291
      %v294 = vld [vmem:[%s192 + $0x4] sm:$0xf]
      %296 = vrot.lane.b32.xlu0 %v294, 17
      %v297 = vpop.permute.xlu0 %296
      %299 = vst.msk [vmem:[#allocation2 + $0x8] sm:$0xf] %vm248, %v297
      %v300 = vld [vmem:[%s192 + $0x4] sm:$0xf]
      %302 = vrot.lane.b32.xlu0 %v300, 17
      %v303 = vpop.permute.xlu0 %302
      %305 = vst.msk [vmem:[#allocation2 + $0x8] sm:$0xf] %vm255, %v303
      %v306 = vld [vmem:[%s192] sm:$0xf]
      %v308 = vcombine.low %v306, %v306
      %309 = vrot.lane.b32.xlu0 %v308, 16
      %v310 = vpop.permute.xlu0 %309
      %vm312 = vcmask 261252
      %313 = vst.msk [vmem:[#allocation2] sm:$0xf0] %vm312, %v310
      %v314 = vld [vmem:[%s192] sm:$0xf]
      %v316 = vcombine.low %v314, %v314
      %317 = vrot.lane.b32.xlu0 %v316, 16
      %v318 = vpop.permute.xlu0 %317
      %vm320 = vcmask 392452
      %321 = vst.msk [vmem:[#allocation2] sm:$0xf0] %vm320, %v318
      %v322 = vld [vmem:[%s192] sm:$0xf]
      %v324 = vcombine.low %v322, %v322
      %325 = vrot.lane.b32.xlu0 %v324, 16
      %v326 = vpop.permute.xlu0 %325
      %vm328 = vcmask 523652
      %329 = vst.msk [vmem:[#allocation2] sm:$0xf0] %vm328, %v326
      %v330 = vld [vmem:[%s192] sm:$0xf]
      %v332 = vcombine.low %v330, %v330
      %333 = vrot.lane.b32.xlu0 %v332, 16
      %v334 = vpop.permute.xlu0 %333
      %vm336 = vcmask 654852
      %337 = vst.msk [vmem:[#allocation2] sm:$0xf0] %vm336, %v334
      %v338 = vld [vmem:[%s192] sm:$0xf]
      %v340 = vcombine.low %v338, %v338
      %341 = vrot.lane.b32.xlu0 %v340, 16
      %v342 = vpop.permute.xlu0 %341
      %vm344 = vcmask 786052
      %345 = vst.msk [vmem:[#allocation2] sm:$0xf0] %vm344, %v342
      %v346 = vld [vmem:[%s192] sm:$0xf]
      %v348 = vcombine.low %v346, %v346
      %349 = vrot.lane.b32.xlu0 %v348, 16
      %v350 = vpop.permute.xlu0 %349
      %vm352 = vcmask 917252
      %353 = vst.msk [vmem:[#allocation2] sm:$0xf0] %vm352, %v350
      %v354 = vld [vmem:[%s192] sm:$0xf]
      %v356 = vcombine.low %v354, %v354
      %357 = vrot.lane.b32.xlu0 %v356, 16
      %v358 = vpop.permute.xlu0 %357
      %vm360 = vcmask 1048452
      %361 = vst.msk [vmem:[#allocation2] sm:$0xf0] %vm360, %v358
      %v362 = vld [vmem:[%s192] sm:$0xf]
      %v364 = vcombine.low %v362, %v362
      %365 = vrot.lane.b32.xlu0 %v364, 16
      %v366 = vpop.permute.xlu0 %365
      %vm368 = vcmask 130052
      %369 = vst.msk [vmem:[#allocation2 + $0x8] sm:$0xf0] %vm368, %v366
      %v370 = vld [vmem:[%s192 + $0x4] sm:$0xf]
      %v372 = vcombine.low %v370, %v370
      %373 = vrot.lane.b32.xlu0 %v372, 16
      %v374 = vpop.permute.xlu0 %373
      %376 = vst.msk [vmem:[#allocation2 + $0x8] sm:$0xf0] %vm312, %v374
      %v377 = vld [vmem:[%s192 + $0x4] sm:$0xf]
      %v379 = vcombine.low %v377, %v377
      %380 = vrot.lane.b32.xlu0 %v379, 16
      %v381 = vpop.permute.xlu0 %380
      %383 = vst.msk [vmem:[#allocation2 + $0x8] sm:$0xf0] %vm320, %v381
      %v384 = vld [vmem:[%s192 + $0x4] sm:$0xf]
      %v386 = vcombine.low %v384, %v384
      %387 = vrot.lane.b32.xlu0 %v386, 16
      %v388 = vpop.permute.xlu0 %387
      %390 = vst.msk [vmem:[#allocation2 + $0x8] sm:$0xf0] %vm328, %v388
      %v391 = vld [vmem:[%s192 + $0x4] sm:$0xf]
      %v393 = vcombine.low %v391, %v391
      %394 = vrot.lane.b32.xlu0 %v393, 16
      %v395 = vpop.permute.xlu0 %394
      %397 = vst.msk [vmem:[#allocation2 + $0x8] sm:$0xf0] %vm336, %v395
      %v398 = vld [vmem:[%s192 + $0x4] sm:$0xf]
      %v400 = vcombine.low %v398, %v398
      %401 = vrot.lane.b32.xlu0 %v400, 16
      %v402 = vpop.permute.xlu0 %401
      %404 = vst.msk [vmem:[#allocation2 + $0x8] sm:$0xf0] %vm344, %v402
      %v405 = vld [vmem:[%s192 + $0x4] sm:$0xf]
      %v407 = vcombine.low %v405, %v405
      %408 = vrot.lane.b32.xlu0 %v407, 16
      %v409 = vpop.permute.xlu0 %408
      %411 = vst.msk [vmem:[#allocation2 + $0x8] sm:$0xf0] %vm352, %v409
      %v412 = vld [vmem:[%s192 + $0x4] sm:$0xf]
      %v414 = vcombine.low %v412, %v412
      %415 = vrot.lane.b32.xlu0 %v414, 16
      %v416 = vpop.permute.xlu0 %415
      %418 = vst.msk [vmem:[#allocation2 + $0x8] sm:$0xf0] %vm360, %v416
      %v419 = vld [vmem:[%s192] sm:$0xf]
      %421 = vrot.lane.b32.xlu0 %v419, 15
      %v422 = vpop.permute.xlu0 %421
      %vm424 = vcmask 248960
      %425 = vst.msk [vmem:[#allocation2 + $0x10] sm:$0xf] %vm424, %v422
      %v426 = vld [vmem:[%s192] sm:$0xf]
      %428 = vrot.lane.b32.xlu0 %v426, 15
      %v429 = vpop.permute.xlu0 %428
      %vm431 = vcmask 380160
      %432 = vst.msk [vmem:[#allocation2 + $0x10] sm:$0xf] %vm431, %v429
      %v433 = vld [vmem:[%s192] sm:$0xf]
      %435 = vrot.lane.b32.xlu0 %v433, 15
      %v436 = vpop.permute.xlu0 %435
      %vm438 = vcmask 511360
      %439 = vst.msk [vmem:[#allocation2 + $0x10] sm:$0xf] %vm438, %v436
      %v440 = vld [vmem:[%s192] sm:$0xf]
      %442 = vrot.lane.b32.xlu0 %v440, 15
      %v443 = vpop.permute.xlu0 %442
      %vm445 = vcmask 642560
      %446 = vst.msk [vmem:[#allocation2 + $0x10] sm:$0xf] %vm445, %v443
      %v447 = vld [vmem:[%s192] sm:$0xf]
      %449 = vrot.lane.b32.xlu0 %v447, 15
      %v450 = vpop.permute.xlu0 %449
      %vm452 = vcmask 773760
      %453 = vst.msk [vmem:[#allocation2 + $0x10] sm:$0xf] %vm452, %v450
      %v454 = vld [vmem:[%s192] sm:$0xf]
      %456 = vrot.lane.b32.xlu0 %v454, 15
      %v457 = vpop.permute.xlu0 %456
      %vm459 = vcmask 904960
      %460 = vst.msk [vmem:[#allocation2 + $0x10] sm:$0xf] %vm459, %v457
      %v461 = vld [vmem:[%s192] sm:$0xf]
      %463 = vrot.lane.b32.xlu0 %v461, 15
      %v464 = vpop.permute.xlu0 %463
      %vm466 = vcmask 1036160
      %467 = vst.msk [vmem:[#allocation2 + $0x10] sm:$0xf] %vm466, %v464
      %v468 = vld [vmem:[%s192] sm:$0xf]
      %470 = vrot.lane.b32.xlu0 %v468, 15
      %v471 = vpop.permute.xlu0 %470
      %vm473 = vcmask 117760
      %474 = vst.msk [vmem:[#allocation2 + $0x18] sm:$0xf] %vm473, %v471
      %v475 = vld [vmem:[%s192 + $0x4] sm:$0xf]
      %477 = vrot.lane.b32.xlu0 %v475, 15
      %v478 = vpop.permute.xlu0 %477
      %480 = vst.msk [vmem:[#allocation2 + $0x18] sm:$0xf] %vm424, %v478
      %v481 = vld [vmem:[%s192 + $0x4] sm:$0xf]
      %483 = vrot.lane.b32.xlu0 %v481, 15
      %v484 = vpop.permute.xlu0 %483
      %486 = vst.msk [vmem:[#allocation2 + $0x18] sm:$0xf] %vm431, %v484
      %v487 = vld [vmem:[%s192 + $0x4] sm:$0xf]
      %489 = vrot.lane.b32.xlu0 %v487, 15
      %v490 = vpop.permute.xlu0 %489
      %492 = vst.msk [vmem:[#allocation2 + $0x18] sm:$0xf] %vm438, %v490
      %v493 = vld [vmem:[%s192 + $0x4] sm:$0xf]
      %495 = vrot.lane.b32.xlu0 %v493, 15
      %v496 = vpop.permute.xlu0 %495
      %498 = vst.msk [vmem:[#allocation2 + $0x18] sm:$0xf] %vm445, %v496
      %v499 = vld [vmem:[%s192 + $0x4] sm:$0xf]
      %501 = vrot.lane.b32.xlu0 %v499, 15
      %v502 = vpop.permute.xlu0 %501
      %504 = vst.msk [vmem:[#allocation2 + $0x18] sm:$0xf] %vm452, %v502
      %v505 = vld [vmem:[%s192 + $0x4] sm:$0xf]
      %507 = vrot.lane.b32.xlu0 %v505, 15
      %v508 = vpop.permute.xlu0 %507
      %510 = vst.msk [vmem:[#allocation2 + $0x18] sm:$0xf] %vm459, %v508
      %v511 = vld [vmem:[%s192 + $0x4] sm:$0xf]
      %513 = vrot.lane.b32.xlu0 %v511, 15
      %v514 = vpop.permute.xlu0 %513
      %516 = vst.msk [vmem:[#allocation2 + $0x18] sm:$0xf] %vm466, %v514
      %v517 = vld [vmem:[%s192] sm:$0xf]
      %v519 = vcombine.low %v517, %v517
      %520 = vrot.lane.b32.xlu0 %v519, 1
      %v521 = vpop.permute.xlu0 %520
      %vm523 = vcmask 130060
      %524 = vst.msk [vmem:[#allocation2 + $0x10] sm:$0xf0] %vm523, %v521
      %v525 = vld [vmem:[%s192] sm:$0xf]
      %v527 = vcombine.low %v525, %v525
      %528 = vrot.lane.b32.xlu0 %v527, 1
      %v529 = vpop.permute.xlu0 %528
      %vm531 = vcmask 261260
      %532 = vst.msk [vmem:[#allocation2 + $0x10] sm:$0xf0] %vm531, %v529
      %v533 = vld [vmem:[%s192] sm:$0xf]
      %v535 = vcombine.low %v533, %v533
      %536 = vrot.lane.b32.xlu0 %v535, 1
      %v537 = vpop.permute.xlu0 %536
      %vm539 = vcmask 392460
      %540 = vst.msk [vmem:[#allocation2 + $0x10] sm:$0xf0] %vm539, %v537
      %v541 = vld [vmem:[%s192] sm:$0xf]
      %v543 = vcombine.low %v541, %v541
      %544 = vrot.lane.b32.xlu0 %v543, 1
      %v545 = vpop.permute.xlu0 %544
      %vm547 = vcmask 523660
      %548 = vst.msk [vmem:[#allocation2 + $0x10] sm:$0xf0] %vm547, %v545
      %v549 = vld [vmem:[%s192] sm:$0xf]
      %v551 = vcombine.low %v549, %v549
      %552 = vrot.lane.b32.xlu0 %v551, 1
      %v553 = vpop.permute.xlu0 %552
      %vm555 = vcmask 654860
      %556 = vst.msk [vmem:[#allocation2 + $0x10] sm:$0xf0] %vm555, %v553
      %v557 = vld [vmem:[%s192] sm:$0xf]
      %v559 = vcombine.low %v557, %v557
      %560 = vrot.lane.b32.xlu0 %v559, 1
      %v561 = vpop.permute.xlu0 %560
      %vm563 = vcmask 786060
      %564 = vst.msk [vmem:[#allocation2 + $0x10] sm:$0xf0] %vm563, %v561
      %v565 = vld [vmem:[%s192] sm:$0xf]
      %v567 = vcombine.low %v565, %v565
      %568 = vrot.lane.b32.xlu0 %v567, 1
      %v569 = vpop.permute.xlu0 %568
      %vm571 = vcmask 917260
      %572 = vst.msk [vmem:[#allocation2 + $0x10] sm:$0xf0] %vm571, %v569
      %v573 = vld [vmem:[%s192] sm:$0xf]
      %v575 = vcombine.low %v573, %v573
      %576 = vrot.lane.b32.xlu0 %v575, 1
      %v577 = vpop.permute.xlu0 %576
      %vm579 = vcmask 1048460
      %580 = vst.msk [vmem:[#allocation2 + $0x10] sm:$0xf0] %vm579, %v577
      %v581 = vld [vmem:[%s192 + $0x4] sm:$0xf]
      %v583 = vcombine.low %v581, %v581
      %584 = vrot.lane.b32.xlu0 %v583, 1
      %v585 = vpop.permute.xlu0 %584
      %587 = vst.msk [vmem:[#allocation2 + $0x18] sm:$0xf0] %vm523, %v585
      %v588 = vld [vmem:[%s192 + $0x4] sm:$0xf]
      %v590 = vcombine.low %v588, %v588
      %591 = vrot.lane.b32.xlu0 %v590, 1
      %v592 = vpop.permute.xlu0 %591
      %594 = vst.msk [vmem:[#allocation2 + $0x18] sm:$0xf0] %vm531, %v592
      %v595 = vld [vmem:[%s192 + $0x4] sm:$0xf]
      %v597 = vcombine.low %v595, %v595
      %598 = vrot.lane.b32.xlu0 %v597, 1
      %v599 = vpop.permute.xlu0 %598
      %601 = vst.msk [vmem:[#allocation2 + $0x18] sm:$0xf0] %vm539, %v599
      %v602 = vld [vmem:[%s192 + $0x4] sm:$0xf]
      %v604 = vcombine.low %v602, %v602
      %605 = vrot.lane.b32.xlu0 %v604, 1
      %v606 = vpop.permute.xlu0 %605
      %608 = vst.msk [vmem:[#allocation2 + $0x18] sm:$0xf0] %vm547, %v606
      %v609 = vld [vmem:[%s192 + $0x4] sm:$0xf]
      %v611 = vcombine.low %v609, %v609
      %612 = vrot.lane.b32.xlu0 %v611, 1
      %v613 = vpop.permute.xlu0 %612
      %615 = vst.msk [vmem:[#allocation2 + $0x18] sm:$0xf0] %vm555, %v613
      %v616 = vld [vmem:[%s192 + $0x4] sm:$0xf]
      %v618 = vcombine.low %v616, %v616
      %619 = vrot.lane.b32.xlu0 %v618, 1
      %v620 = vpop.permute.xlu0 %619
      %622 = vst.msk [vmem:[#allocation2 + $0x18] sm:$0xf0] %vm563, %v620
      %v623 = vld [vmem:[%s192 + $0x4] sm:$0xf]
      %v625 = vcombine.low %v623, %v623
      %626 = vrot.lane.b32.xlu0 %v625, 1
      %v627 = vpop.permute.xlu0 %626
      %629 = vst.msk [vmem:[#allocation2 + $0x18] sm:$0xf0] %vm571, %v627
      %v630 = vld [vmem:[%s192 + $0x4] sm:$0xf]
      %v632 = vcombine.low %v630, %v630
      %633 = vrot.lane.b32.xlu0 %v632, 1
      %v634 = vpop.permute.xlu0 %633
      %636 = vst.msk [vmem:[#allocation2 + $0x18] sm:$0xf0] %vm579, %v634
      %v637 = vld [vmem:[%s192] sm:$0xf]
      %vm638 = vcmask 125952
      %639 = vst.msk [vmem:[#allocation2 + $0x20] sm:$0xf] %vm638, %v637
      %v640 = vld [vmem:[%s192] sm:$0xf]
      %vm641 = vcmask 257152
      %642 = vst.msk [vmem:[#allocation2 + $0x20] sm:$0xf] %vm641, %v640
      %v643 = vld [vmem:[%s192] sm:$0xf]
      %vm644 = vcmask 388352
      %645 = vst.msk [vmem:[#allocation2 + $0x20] sm:$0xf] %vm644, %v643
      %v646 = vld [vmem:[%s192] sm:$0xf]
      %vm647 = vcmask 519552
      %648 = vst.msk [vmem:[#allocation2 + $0x20] sm:$0xf] %vm647, %v646
      %v649 = vld [vmem:[%s192] sm:$0xf]
      %vm650 = vcmask 650752
      %651 = vst.msk [vmem:[#allocation2 + $0x20] sm:$0xf] %vm650, %v649
      %v652 = vld [vmem:[%s192] sm:$0xf]
      %vm653 = vcmask 781952
      %654 = vst.msk [vmem:[#allocation2 + $0x20] sm:$0xf] %vm653, %v652
      %v655 = vld [vmem:[%s192] sm:$0xf]
      %vm656 = vcmask 913152
      %657 = vst.msk [vmem:[#allocation2 + $0x20] sm:$0xf] %vm656, %v655
      %v658 = vld [vmem:[%s192] sm:$0xf]
      %vm659 = vcmask 1044352
      %660 = vst.msk [vmem:[#allocation2 + $0x20] sm:$0xf] %vm659, %v658
      %v661 = vld [vmem:[%s192 + $0x4] sm:$0xf]
      %662 = vst.msk [vmem:[#allocation2 + $0x28] sm:$0xf] %vm638, %v661
      %v663 = vld [vmem:[%s192 + $0x4] sm:$0xf]
      %664 = vst.msk [vmem:[#allocation2 + $0x28] sm:$0xf] %vm641, %v663
      %v665 = vld [vmem:[%s192 + $0x4] sm:$0xf]
      %666 = vst.msk [vmem:[#allocation2 + $0x28] sm:$0xf] %vm644, %v665
      %v667 = vld [vmem:[%s192 + $0x4] sm:$0xf]
      %668 = vst.msk [vmem:[#allocation2 + $0x28] sm:$0xf] %vm647, %v667
      %v669 = vld [vmem:[%s192 + $0x4] sm:$0xf]
      %670 = vst.msk [vmem:[#allocation2 + $0x28] sm:$0xf] %vm650, %v669
      %v671 = vld [vmem:[%s192 + $0x4] sm:$0xf]
      %672 = vst.msk [vmem:[#allocation2 + $0x28] sm:$0xf] %vm653, %v671
      %v673 = vld [vmem:[%s192 + $0x4] sm:$0xf]
      %674 = vst.msk [vmem:[#allocation2 + $0x28] sm:$0xf] %vm656, %v673
      %v675 = vld [vmem:[%s192 + $0x4] sm:$0xf]
      %676 = vst.msk [vmem:[#allocation2 + $0x28] sm:$0xf] %vm659, %v675
      %v677 = vld [vmem:[%s192] sm:$0xf]
      %v679 = vcombine.low %v677, %v677
      %680 = vrot.lane.b32.xlu0 %v679, 127
      %v681 = vpop.permute.xlu0 %680
      %vm683 = vcmask 121860
      %684 = vst.msk [vmem:[#allocation2 + $0x20] sm:$0xf0] %vm683, %v681
      %v685 = vld [vmem:[%s192] sm:$0xf]
      %v687 = vcombine.low %v685, %v685
      %688 = vrot.lane.b32.xlu0 %v687, 127
      %v689 = vpop.permute.xlu0 %688
      %vm691 = vcmask 253060
      %692 = vst.msk [vmem:[#allocation2 + $0x20] sm:$0xf0] %vm691, %v689
      %v693 = vld [vmem:[%s192] sm:$0xf]
      %v695 = vcombine.low %v693, %v693
      %696 = vrot.lane.b32.xlu0 %v695, 127
      %v697 = vpop.permute.xlu0 %696
      %vm699 = vcmask 384260
      %700 = vst.msk [vmem:[#allocation2 + $0x20] sm:$0xf0] %vm699, %v697
      %v701 = vld [vmem:[%s192] sm:$0xf]
      %v703 = vcombine.low %v701, %v701
      %704 = vrot.lane.b32.xlu0 %v703, 127
      %v705 = vpop.permute.xlu0 %704
      %vm707 = vcmask 515460
      %708 = vst.msk [vmem:[#allocation2 + $0x20] sm:$0xf0] %vm707, %v705
      %v709 = vld [vmem:[%s192] sm:$0xf]
      %v711 = vcombine.low %v709, %v709
      %712 = vrot.lane.b32.xlu0 %v711, 127
      %v713 = vpop.permute.xlu0 %712
      %vm715 = vcmask 646660
      %716 = vst.msk [vmem:[#allocation2 + $0x20] sm:$0xf0] %vm715, %v713
      %v717 = vld [vmem:[%s192] sm:$0xf]
      %v719 = vcombine.low %v717, %v717
      %720 = vrot.lane.b32.xlu0 %v719, 127
      %v721 = vpop.permute.xlu0 %720
      %vm723 = vcmask 777860
      %724 = vst.msk [vmem:[#allocation2 + $0x20] sm:$0xf0] %vm723, %v721
      %v725 = vld [vmem:[%s192] sm:$0xf]
      %v727 = vcombine.low %v725, %v725
      %728 = vrot.lane.b32.xlu0 %v727, 127
      %v729 = vpop.permute.xlu0 %728
      %vm731 = vcmask 909060
      %732 = vst.msk [vmem:[#allocation2 + $0x20] sm:$0xf0] %vm731, %v729
      %v733 = vld [vmem:[%s192] sm:$0xf]
      %v735 = vcombine.low %v733, %v733
      %736 = vrot.lane.b32.xlu0 %v735, 127
      %v737 = vpop.permute.xlu0 %736
      %vm739 = vcmask 1040260
      %740 = vst.msk [vmem:[#allocation2 + $0x20] sm:$0xf0] %vm739, %v737
      %v741 = vld [vmem:[%s192 + $0x4] sm:$0xf]
      %v743 = vcombine.low %v741, %v741
      %744 = vrot.lane.b32.xlu0 %v743, 127
      %v745 = vpop.permute.xlu0 %744
      %747 = vst.msk [vmem:[#allocation2 + $0x28] sm:$0xf0] %vm683, %v745
      %v748 = vld [vmem:[%s192 + $0x4] sm:$0xf]
      %v750 = vcombine.low %v748, %v748
      %751 = vrot.lane.b32.xlu0 %v750, 127
      %v752 = vpop.permute.xlu0 %751
      %754 = vst.msk [vmem:[#allocation2 + $0x28] sm:$0xf0] %vm691, %v752
      %v755 = vld [vmem:[%s192 + $0x4] sm:$0xf]
      %v757 = vcombine.low %v755, %v755
      %758 = vrot.lane.b32.xlu0 %v757, 127
      %v759 = vpop.permute.xlu0 %758
      %761 = vst.msk [vmem:[#allocation2 + $0x28] sm:$0xf0] %vm699, %v759
      %v762 = vld [vmem:[%s192 + $0x4] sm:$0xf]
      %v764 = vcombine.low %v762, %v762
      %765 = vrot.lane.b32.xlu0 %v764, 127
      %v766 = vpop.permute.xlu0 %765
      %768 = vst.msk [vmem:[#allocation2 + $0x28] sm:$0xf0] %vm707, %v766
      %v769 = vld [vmem:[%s192 + $0x4] sm:$0xf]
      %v771 = vcombine.low %v769, %v769
      %772 = vrot.lane.b32.xlu0 %v771, 127
      %v773 = vpop.permute.xlu0 %772
      %775 = vst.msk [vmem:[#allocation2 + $0x28] sm:$0xf0] %vm715, %v773
      %v776 = vld [vmem:[%s192 + $0x4] sm:$0xf]
      %v778 = vcombine.low %v776, %v776
      %779 = vrot.lane.b32.xlu0 %v778, 127
      %v780 = vpop.permute.xlu0 %779
      %782 = vst.msk [vmem:[#allocation2 + $0x28] sm:$0xf0] %vm723, %v780
      %v783 = vld [vmem:[%s192 + $0x4] sm:$0xf]
      %v785 = vcombine.low %v783, %v783
      %786 = vrot.lane.b32.xlu0 %v785, 127
      %v787 = vpop.permute.xlu0 %786
      %789 = vst.msk [vmem:[#allocation2 + $0x28] sm:$0xf0] %vm731, %v787
      %v790 = vld [vmem:[%s192 + $0x4] sm:$0xf]
      %v792 = vcombine.low %v790, %v790
      %793 = vrot.lane.b32.xlu0 %v792, 127
      %v794 = vpop.permute.xlu0 %793
      %796 = vst.msk [vmem:[#allocation2 + $0x28] sm:$0xf0] %vm739, %v794
      %v797 = vld [vmem:[%s192] sm:$0xf]
      %799 = vrot.lane.b32.xlu0 %v797, 113
      %v800 = vpop.permute.xlu0 %799
      %802 = vst.msk [vmem:[#allocation2 + $0x30] sm:$0xf] %vm262, %v800
      %v803 = vld [vmem:[%s192] sm:$0xf]
      %805 = vrot.lane.b32.xlu0 %v803, 113
      %v806 = vpop.permute.xlu0 %805
      %808 = vst.msk [vmem:[#allocation2 + $0x30] sm:$0xf] %vm213, %v806
      %v809 = vld [vmem:[%s192] sm:$0xf]
      %811 = vrot.lane.b32.xlu0 %v809, 113
      %v812 = vpop.permute.xlu0 %811
      %814 = vst.msk [vmem:[#allocation2 + $0x30] sm:$0xf] %vm220, %v812
      %v815 = vld [vmem:[%s192] sm:$0xf]
      %817 = vrot.lane.b32.xlu0 %v815, 113
      %v818 = vpop.permute.xlu0 %817
      %820 = vst.msk [vmem:[#allocation2 + $0x30] sm:$0xf] %vm227, %v818
      %v821 = vld [vmem:[%s192] sm:$0xf]
      %823 = vrot.lane.b32.xlu0 %v821, 113
      %v824 = vpop.permute.xlu0 %823
      %826 = vst.msk [vmem:[#allocation2 + $0x30] sm:$0xf] %vm234, %v824
      %v827 = vld [vmem:[%s192] sm:$0xf]
      %829 = vrot.lane.b32.xlu0 %v827, 113
      %v830 = vpop.permute.xlu0 %829
      %832 = vst.msk [vmem:[#allocation2 + $0x30] sm:$0xf] %vm241, %v830
      %v833 = vld [vmem:[%s192] sm:$0xf]
      %835 = vrot.lane.b32.xlu0 %v833, 113
      %v836 = vpop.permute.xlu0 %835
      %838 = vst.msk [vmem:[#allocation2 + $0x30] sm:$0xf] %vm248, %v836
      %v839 = vld [vmem:[%s192 + $0x4] sm:$0xf]
      %841 = vrot.lane.b32.xlu0 %v839, 113
      %v842 = vpop.permute.xlu0 %841
      %844 = vst.msk [vmem:[#allocation2 + $0x30] sm:$0xf] %vm255, %v842
      %v845 = vld [vmem:[%s192 + $0x4] sm:$0xf]
      %847 = vrot.lane.b32.xlu0 %v845, 113
      %v848 = vpop.permute.xlu0 %847
      %850 = vst.msk [vmem:[#allocation2 + $0x38] sm:$0xf] %vm262, %v848
      %v851 = vld [vmem:[%s192 + $0x4] sm:$0xf]
      %853 = vrot.lane.b32.xlu0 %v851, 113
      %v854 = vpop.permute.xlu0 %853
      %856 = vst.msk [vmem:[#allocation2 + $0x38] sm:$0xf] %vm213, %v854
      %v857 = vld [vmem:[%s192 + $0x4] sm:$0xf]
      %859 = vrot.lane.b32.xlu0 %v857, 113
      %v860 = vpop.permute.xlu0 %859
      %862 = vst.msk [vmem:[#allocation2 + $0x38] sm:$0xf] %vm220, %v860
      %v863 = vld [vmem:[%s192 + $0x4] sm:$0xf]
      %865 = vrot.lane.b32.xlu0 %v863, 113
      %v866 = vpop.permute.xlu0 %865
      %868 = vst.msk [vmem:[#allocation2 + $0x38] sm:$0xf] %vm227, %v866
      %v869 = vld [vmem:[%s192 + $0x4] sm:$0xf]
      %871 = vrot.lane.b32.xlu0 %v869, 113
      %v872 = vpop.permute.xlu0 %871
      %874 = vst.msk [vmem:[#allocation2 + $0x38] sm:$0xf] %vm234, %v872
      %v875 = vld [vmem:[%s192 + $0x4] sm:$0xf]
      %877 = vrot.lane.b32.xlu0 %v875, 113
      %v878 = vpop.permute.xlu0 %877
      %880 = vst.msk [vmem:[#allocation2 + $0x38] sm:$0xf] %vm241, %v878
      %v881 = vld [vmem:[%s192 + $0x4] sm:$0xf]
      %883 = vrot.lane.b32.xlu0 %v881, 113
      %v884 = vpop.permute.xlu0 %883
      %886 = vst.msk [vmem:[#allocation2 + $0x38] sm:$0xf] %vm248, %v884
      %v887 = vld [vmem:[%s192] sm:$0xf]
      %v889 = vcombine.low %v887, %v887
      %890 = vrot.lane.b32.xlu0 %v889, 112
      %v891 = vpop.permute.xlu0 %890
      %893 = vst.msk [vmem:[#allocation2 + $0x30] sm:$0xf0] %vm368, %v891
      %v894 = vld [vmem:[%s192] sm:$0xf]
      %v896 = vcombine.low %v894, %v894
      %897 = vrot.lane.b32.xlu0 %v896, 112
      %v898 = vpop.permute.xlu0 %897
      %900 = vst.msk [vmem:[#allocation2 + $0x30] sm:$0xf0] %vm312, %v898
      %v901 = vld [vmem:[%s192] sm:$0xf]
      %v903 = vcombine.low %v901, %v901
      %904 = vrot.lane.b32.xlu0 %v903, 112
      %v905 = vpop.permute.xlu0 %904
      %907 = vst.msk [vmem:[#allocation2 + $0x30] sm:$0xf0] %vm320, %v905
      %v908 = vld [vmem:[%s192] sm:$0xf]
      %v910 = vcombine.low %v908, %v908
      %911 = vrot.lane.b32.xlu0 %v910, 112
      %v912 = vpop.permute.xlu0 %911
      %914 = vst.msk [vmem:[#allocation2 + $0x30] sm:$0xf0] %vm328, %v912
      %v915 = vld [vmem:[%s192] sm:$0xf]
      %v917 = vcombine.low %v915, %v915
      %918 = vrot.lane.b32.xlu0 %v917, 112
      %v919 = vpop.permute.xlu0 %918
      %921 = vst.msk [vmem:[#allocation2 + $0x30] sm:$0xf0] %vm336, %v919
      %v922 = vld [vmem:[%s192] sm:$0xf]
      %v924 = vcombine.low %v922, %v922
      %925 = vrot.lane.b32.xlu0 %v924, 112
      %v926 = vpop.permute.xlu0 %925
      %928 = vst.msk [vmem:[#allocation2 + $0x30] sm:$0xf0] %vm344, %v926
      %v929 = vld [vmem:[%s192] sm:$0xf]
      %v931 = vcombine.low %v929, %v929
      %932 = vrot.lane.b32.xlu0 %v931, 112
      %v933 = vpop.permute.xlu0 %932
      %935 = vst.msk [vmem:[#allocation2 + $0x30] sm:$0xf0] %vm352, %v933
      %v936 = vld [vmem:[%s192 + $0x4] sm:$0xf]
      %v938 = vcombine.low %v936, %v936
      %939 = vrot.lane.b32.xlu0 %v938, 112
      %v940 = vpop.permute.xlu0 %939
      %942 = vst.msk [vmem:[#allocation2 + $0x30] sm:$0xf0] %vm360, %v940
      %v943 = vld [vmem:[%s192 + $0x4] sm:$0xf]
      %v945 = vcombine.low %v943, %v943
      %946 = vrot.lane.b32.xlu0 %v945, 112
      %v947 = vpop.permute.xlu0 %946
      %949 = vst.msk [vmem:[#allocation2 + $0x38] sm:$0xf0] %vm368, %v947
      %v950 = vld [vmem:[%s192 + $0x4] sm:$0xf]
      %v952 = vcombine.low %v950, %v950
      %953 = vrot.lane.b32.xlu0 %v952, 112
      %v954 = vpop.permute.xlu0 %953
      %956 = vst.msk [vmem:[#allocation2 + $0x38] sm:$0xf0] %vm312, %v954
      %v957 = vld [vmem:[%s192 + $0x4] sm:$0xf]
      %v959 = vcombine.low %v957, %v957
      %960 = vrot.lane.b32.xlu0 %v959, 112
      %v961 = vpop.permute.xlu0 %960
      %963 = vst.msk [vmem:[#allocation2 + $0x38] sm:$0xf0] %vm320, %v961
      %v964 = vld [vmem:[%s192 + $0x4] sm:$0xf]
      %v966 = vcombine.low %v964, %v964
      %967 = vrot.lane.b32.xlu0 %v966, 112
      %v968 = vpop.permute.xlu0 %967
      %970 = vst.msk [vmem:[#allocation2 + $0x38] sm:$0xf0] %vm328, %v968
      %v971 = vld [vmem:[%s192 + $0x4] sm:$0xf]
      %v973 = vcombine.low %v971, %v971
      %974 = vrot.lane.b32.xlu0 %v973, 112
      %v975 = vpop.permute.xlu0 %974
      %977 = vst.msk [vmem:[#allocation2 + $0x38] sm:$0xf0] %vm336, %v975
      %v978 = vld [vmem:[%s192 + $0x4] sm:$0xf]
      %v980 = vcombine.low %v978, %v978
      %981 = vrot.lane.b32.xlu0 %v980, 112
      %v982 = vpop.permute.xlu0 %981
      %984 = vst.msk [vmem:[#allocation2 + $0x38] sm:$0xf0] %vm344, %v982
      %v985 = vld [vmem:[%s192 + $0x4] sm:$0xf]
      %v987 = vcombine.low %v985, %v985
      %988 = vrot.lane.b32.xlu0 %v987, 112
      %v989 = vpop.permute.xlu0 %988
      %991 = vst.msk [vmem:[#allocation2 + $0x38] sm:$0xf0] %vm352, %v989
      %v992 = vld [vmem:[%s192] sm:$0xf]
      %994 = vrot.lane.b32.xlu0 %v992, 111
      %v995 = vpop.permute.xlu0 %994
      %997 = vst.msk [vmem:[#allocation2 + $0x40] sm:$0xf] %vm473, %v995
      %v998 = vld [vmem:[%s192] sm:$0xf]
      %1000 = vrot.lane.b32.xlu0 %v998, 111
      %v1001 = vpop.permute.xlu0 %1000
      %1003 = vst.msk [vmem:[#allocation2 + $0x40] sm:$0xf] %vm424, %v1001
      %v1004 = vld [vmem:[%s192] sm:$0xf]
      %1006 = vrot.lane.b32.xlu0 %v1004, 111
      %v1007 = vpop.permute.xlu0 %1006
      %1009 = vst.msk [vmem:[#allocation2 + $0x40] sm:$0xf] %vm431, %v1007
      %v1010 = vld [vmem:[%s192] sm:$0xf]
      %1012 = vrot.lane.b32.xlu0 %v1010, 111
      %v1013 = vpop.permute.xlu0 %1012
      %1015 = vst.msk [vmem:[#allocation2 + $0x40] sm:$0xf] %vm438, %v1013
      %v1016 = vld [vmem:[%s192] sm:$0xf]
      %1018 = vrot.lane.b32.xlu0 %v1016, 111
      %v1019 = vpop.permute.xlu0 %1018
      %1021 = vst.msk [vmem:[#allocation2 + $0x40] sm:$0xf] %vm445, %v1019
      %v1022 = vld [vmem:[%s192] sm:$0xf]
      %1024 = vrot.lane.b32.xlu0 %v1022, 111
      %v1025 = vpop.permute.xlu0 %1024
      %1027 = vst.msk [vmem:[#allocation2 + $0x40] sm:$0xf] %vm452, %v1025
      %v1028 = vld [vmem:[%s192] sm:$0xf]
      %1030 = vrot.lane.b32.xlu0 %v1028, 111
      %v1031 = vpop.permute.xlu0 %1030
      %1033 = vst.msk [vmem:[#allocation2 + $0x40] sm:$0xf] %vm459, %v1031
      %v1034 = vld [vmem:[%s192 + $0x4] sm:$0xf]
      %1036 = vrot.lane.b32.xlu0 %v1034, 111
      %v1037 = vpop.permute.xlu0 %1036
      %1039 = vst.msk [vmem:[#allocation2 + $0x40] sm:$0xf] %vm466, %v1037
      %v1040 = vld [vmem:[%s192 + $0x4] sm:$0xf]
      %1042 = vrot.lane.b32.xlu0 %v1040, 111
      %v1043 = vpop.permute.xlu0 %1042
      %1045 = vst.msk [vmem:[#allocation2 + $0x48] sm:$0xf] %vm473, %v1043
      %v1046 = vld [vmem:[%s192 + $0x4] sm:$0xf]
      %1048 = vrot.lane.b32.xlu0 %v1046, 111
      %v1049 = vpop.permute.xlu0 %1048
      %1051 = vst.msk [vmem:[#allocation2 + $0x48] sm:$0xf] %vm424, %v1049
      %v1052 = vld [vmem:[%s192 + $0x4] sm:$0xf]
      %1054 = vrot.lane.b32.xlu0 %v1052, 111
      %v1055 = vpop.permute.xlu0 %1054
      %1057 = vst.msk [vmem:[#allocation2 + $0x48] sm:$0xf] %vm431, %v1055
      %v1058 = vld [vmem:[%s192 + $0x4] sm:$0xf]
      %1060 = vrot.lane.b32.xlu0 %v1058, 111
      %v1061 = vpop.permute.xlu0 %1060
      %1063 = vst.msk [vmem:[#allocation2 + $0x48] sm:$0xf] %vm438, %v1061
      %v1064 = vld [vmem:[%s192 + $0x4] sm:$0xf]
      %1066 = vrot.lane.b32.xlu0 %v1064, 111
      %v1067 = vpop.permute.xlu0 %1066
      %1069 = vst.msk [vmem:[#allocation2 + $0x48] sm:$0xf] %vm445, %v1067
      %v1070 = vld [vmem:[%s192 + $0x4] sm:$0xf]
      %1072 = vrot.lane.b32.xlu0 %v1070, 111
      %v1073 = vpop.permute.xlu0 %1072
      %1075 = vst.msk [vmem:[#allocation2 + $0x48] sm:$0xf] %vm452, %v1073
      %v1076 = vld [vmem:[%s192 + $0x4] sm:$0xf]
      %1078 = vrot.lane.b32.xlu0 %v1076, 111
      %v1079 = vpop.permute.xlu0 %1078
      %1081 = vst.msk [vmem:[#allocation2 + $0x48] sm:$0xf] %vm459, %v1079
      %v1082 = vld [vmem:[%s1] sm:$0xff]
      %v1083 = vld [vmem:[#allocation2] sm:$0xff]
      %v1084 = vld [vmem:[#allocation2 + $0x8] sm:$0xff]
      %v1085 = vld [vmem:[#allocation2 + $0x10] sm:$0xff]
      %v1086 = vld [vmem:[#allocation2 + $0x18] sm:$0xff]
      %v1087 = vld [vmem:[#allocation2 + $0x20] sm:$0xff]
      %v1088 = vld [vmem:[#allocation2 + $0x28] sm:$0xff]
      %v1089 = vld [vmem:[#allocation2 + $0x30] sm:$0xff]
      %v1090 = vld [vmem:[#allocation2 + $0x38] sm:$0xff]
      %v1091 = vld [vmem:[#allocation2 + $0x40] sm:$0xf]
      %v1092 = vld [vmem:[#allocation2 + $0x48] sm:$0xf]
      %vm1093 = vcmask 293888
      %v1095 = vsel %vm1093, %v1082, 0
      %vm1097 = vcmask 1043456
      %v1099 = vsel %vm1097, %v1091, 0
      %v1102 = vsel %vm1097, %v1092, 0
      %1104 = vmatprep.subr.mxu0 0.0
      %1105 = vmatpush1.msra.mxu0 0.0
      %1106 = vmatprep.subr.mxu0 0.0
      %1107 = vmatpush1.msra.mxu0 0.0
      %1108 = vmatprep.subr.mxu0 0.0
      %1109 = vmatpush1.msra.mxu0 0.0
      %1110 = vmatprep.subr.mxu0 0.0
      %1111 = vmatpush1.msra.mxu0 0.0
      %1112 = vmatprep.subr.mxu0 0.0
      %1113 = vmatpush1.msra.mxu0 0.0
      %1114 = vmatprep.subr.mxu0 0.0
      %1115 = vmatpush1.msra.mxu0 0.0
      %1116 = vmatprep.subr.mxu0 0.0
      %1117 = vmatpush1.msra.mxu0 0.0
      %1118 = vmatprep.subr.mxu0 0.0
      %1119 = vmatpush1.msra.mxu0 0.0
      %1120 = vmatprep.subr.mxu0 0.0
      %1121 = vmatpush1.msra.mxu0 0.0
      %1122 = vmatprep.subr.mxu0 0.0
      %1123 = vmatpush1.msra.mxu0 0.0
      %1124 = vmatprep.subr.mxu0 0.0
      %1125 = vmatpush1.msra.mxu0 0.0
      %1126 = vmatprep.subr.mxu0 %v1102
      %1127 = vmatpush1.msra.mxu0 %v1099
      %1128 = vmatprep.subr.mxu0 %v1090
      %1129 = vmatpush1.msra.mxu0 %v1089
      %1130 = vmatprep.subr.mxu0 %v1088
      %1131 = vmatpush1.msra.mxu0 %v1087
      %1132 = vmatprep.subr.mxu0 %v1086
      %1133 = vmatpush1.msra.mxu0 %v1085
      %1134 = vmatprep.subr.mxu0 %v1084
      %1135 = vmatpush1.msra.mxu0 %v1083
      %1136 = vmatprep.subr.mxu0 0.0
      %1137 = vmatpush2.msra.mxu0 0.0
      %1138 = vmatprep.subr.mxu0 0.0
      %1139 = vmatpush2.msra.mxu0 0.0
      %1140 = vmatprep.subr.mxu0 0.0
      %1141 = vmatpush2.msra.mxu0 0.0
      %1142 = vmatprep.subr.mxu0 0.0
      %1143 = vmatpush2.msra.mxu0 0.0
      %1144 = vmatprep.subr.mxu0 0.0
      %1145 = vmatpush2.msra.mxu0 0.0
      %1146 = vmatprep.subr.mxu0 0.0
      %1147 = vmatpush2.msra.mxu0 0.0
      %1148 = vmatprep.subr.mxu0 0.0
      %1149 = vmatpush2.msra.mxu0 0.0
      %1150 = vmatprep.subr.mxu0 0.0
      %1151 = vmatpush2.msra.mxu0 0.0
      %1152 = vmatprep.subr.mxu0 0.0
      %1153 = vmatpush2.msra.mxu0 0.0
      %1154 = vmatprep.subr.mxu0 0.0
      %1155 = vmatpush2.msra.mxu0 0.0
      %1156 = vmatprep.subr.mxu0 0.0
      %1157 = vmatpush2.msra.mxu0 0.0
      %1158 = vmatprep.subr.mxu0 0.0
      %1159 = vmatpush2.msra.mxu0 0.0
      %1160 = vmatprep.subr.mxu0 0.0
      %1161 = vmatpush2.msra.mxu0 0.0
      %1162 = vmatprep.subr.mxu0 0.0
      %1163 = vmatpush2.msra.mxu0 0.0
      %1164 = vmatprep.subr.mxu0 0.0
      %1165 = vmatpush2.msra.mxu0 0.0
      %1166 = vmatprep.subr.mxu0 0.0
      %1167 = vmatpush2.msra.mxu0 0.0
      %1168 = vmatprep.mubr.f32.mxu0 0.0
      %1169 = vmatmul.mubr.f32.gmra.mxu0 %v1095
      %v1170 = vpop.f32.mrf.mxu0
      %v1171 = vadd.f32 0.0, %v1170
      %v1172 = vpop.f32.mrf.mxu0
      %v1173 = vadd.f32 0.0, %v1172
      %1174 = vdwg.mxu0
      %v1175 = vld [vmem:[%s2] sm:$0xff]
      %1177 = vset.pattern.permute.xlu0 0
      %1178 = vperm.xlu0 %1177, %v1175
      %v1179 = vpop.permute.xlu0 %1178
      %v1181 = vmul.f32 %v1171, %v1179
      %v1182 = vmul.f32 %v1173, %v1179
      %v1183 = vld [vmem:[%s3] sm:$0xff]
      %1185 = vset.pattern.permute.xlu0 0
      %1186 = vperm.xlu0 %1185, %v1183
      %v1187 = vpop.permute.xlu0 %1186
      %v1189 = vadd.f32 %v1181, %v1187
      %v1190 = vadd.f32 %v1182, %v1187
      %v1191 = vmax.f32 %v1189, 0.0
      %v1192 = vmax.f32 %v1190, 0.0
      %1193 = vst [vmem:[%s197] sm:$0xff] %v1191
      %1194 = vst [vmem:[%s197 + $0x8] sm:$0xff] %v1192
      %p1195 = scmp.lt.s32.totalorder %s15, 1
      %s1196 = scalar_select %p1195, %s15, 1
      %s1197 = smul.addr %s1196, 2
      %s1198 = smul.addr %s1197, 8
      %s1199 = scalar_lea.vmem %s4, %s1198
      // Predicated region
      $region37: #{basic_conv2d_forward.1} parent=35 // pred_check
        %p1200 = pneg %p122
      $region38: #{basic_conv2d_forward.1} parent=35 // pred_check_branch
        %1202 = sbr.rel (%p1200) target = $region40
      $region39: #{basic_conv2d_forward.1} parent=35 // pred_region
        _
      $region40: #{basic_conv2d_forward.1} parent=35 // pred_fallthru
        _
    $region36: #{basic_conv2d_forward.1} parent=5 // pred_fallthru
      _
    %p1203 = scmp.le.s32.totalorder 2, %s10
    // Predicated region
    $region41: #{basic_conv2d_forward.1} parent=5 // pred_check
      %p1204 = pneg %p1203
    $region42: #{basic_conv2d_forward.1} parent=5 // pred_check_branch
      %1206 = sbr.rel (%p1204) target = $region44
    $region43: #{basic_conv2d_forward.1} parent=5 // pred_region
      %s1207 = ssub.s32 %s10, 2
      // Predicated region
      $region45: #{basic_conv2d_forward.1} parent=43 // pred_check
        %p1208 = pneg %p128
      $region46: #{basic_conv2d_forward.1} parent=43 // pred_check_branch
        %1210 = sbr.rel (%p1208) target = $region48
      $region47: #{basic_conv2d_forward.1} parent=43 // pred_region
        %p1211 = scmp.lt.s32.totalorder %s16, 1
        %s1212 = scalar_select %p1211, %s16, 1
        %s1213 = smul.addr %s1212, 2
        %s1214 = smul.addr %s1213, 8
        %s1215 = scalar_lea.vmem %s4, %s1214
      $region48: #{basic_conv2d_forward.1} parent=43 // pred_fallthru
        _
    $region44: #{basic_conv2d_forward.1} parent=5 // pred_fallthru
      _
  $region6: #{basic_conv2d_forward.1} parent=0 // loop_footer
    %s14 = sadd.s32 1, %s10
  $region7: #{basic_conv2d_forward.1} parent=0 // loop_footer_branch
    %9 = sbr.rel target = $region3
  $region8: #{basic_conv2d_forward.1} parent=0 // loop_exit
    _

</llo_original>
